<compile_context>
chip_gen: v5e
topology: v5e:2x2
jax: 0.10.0
libtpu: 0.0.40
codegen_flags: <defaults>
</compile_context>

<pallas_src>
import jax
import jax.numpy as jnp
from jax.experimental import pallas as pl
from jax.experimental.pallas import tpu as pltpu

NEG_SLOPE = 0.2
BN_EPS = 1e-5

_VMEM = pl.BlockSpec(memory_space=pltpu.MemorySpace.VMEM)


# ---------------------------------------------------------------- kernels ---

def _leaky(y):
    return jnp.where(y >= 0.0, y, NEG_SLOPE * y)


def _gcn_blocks_kernel(
    m2_ref, nf_ref,
    w1_ref, b1_ref, w2_ref, b2_ref, bn1g_ref, bn1b_ref,
    w3_ref, b3_ref, bn2g_ref, bn2b_ref,
    w4_ref, b4_ref, w5_ref, b5_ref, bn3g_ref, bn3b_ref,
    sw_ref,
    x3_ref, sc_ref,
):
    """Fused: 3x (rowsum-scale -> Linear(+LReLU)) + bn1/bn2/bn3 + score."""
    bz, roi, feat8 = x3_ref.shape          # static shapes from the output ref

    # rowsum(m) computed ONCE and reused for all three einsum-scale steps.
    s = jnp.sum(m2_ref[...], axis=-1, keepdims=True)          # (bz*roi, 1)

    def bn_cols(x, g_ref, b_ref):
        # BatchNorm1d on 2D (N, C): per-column batch mean / biased variance.
        mean = jnp.mean(x, axis=0, keepdims=True)
        var = jnp.mean((x - mean) ** 2, axis=0, keepdims=True)
        return (x - mean) * jax.lax.rsqrt(var + BN_EPS) * g_ref[...] + b_ref[...]

    # ---- block 1: einsum -> gcn(Linear, LReLU, Linear) -> bn1
    x = s * nf_ref[...]                                        # (bz*roi, D)
    x = _leaky(jnp.dot(x, w1_ref[...], preferred_element_type=jnp.float32)
               + b1_ref[...])
    x = jnp.dot(x, w2_ref[...], preferred_element_type=jnp.float32) + b2_ref[...]
    x = bn_cols(x, bn1g_ref, bn1b_ref)                         # (bz*roi, roi)

    # ---- block 2: einsum -> gcn1(Linear, LReLU) -> bn2
    x = s * x
    x = _leaky(jnp.dot(x, w3_ref[...], preferred_element_type=jnp.float32)
               + b3_ref[...])
    x = bn_cols(x, bn2g_ref, bn2b_ref)                         # (bz*roi, roi)

    # ---- block 3: einsum -> gcn2(Linear, LReLU, Linear, LReLU) -> bn3
    x = s * x
    x = _leaky(jnp.dot(x, w4_ref[...], preferred_element_type=jnp.float32)
               + b4_ref[...])
    x = _leaky(jnp.dot(x, w5_ref[...], preferred_element_type=jnp.float32)
               + b5_ref[...])                                  # (bz*roi, 8)

    # bn3: BatchNorm1d(roi) on a (bz, roi, 8) view -> per-roi-channel stats
    # over the (bz, 8) elements.  Done directly on the 3D block (no HBM glue).
    x3 = x.reshape(bz, roi, feat8)
    n3 = float(bz * feat8)
    ssum = jnp.sum(jnp.sum(x3, axis=2, keepdims=True), axis=0, keepdims=True)
    mean3 = ssum / n3                                          # (1, roi, 1)
    d = x3 - mean3
    vsum = jnp.sum(jnp.sum(d * d, axis=2, keepdims=True), axis=0, keepdims=True)
    var3 = vsum / n3                                           # (1, roi, 1)
    x3n = d * jax.lax.rsqrt(var3 + BN_EPS) * bn3g_ref[...] + bn3b_ref[...]
    x3_ref[...] = x3n                                          # (bz, roi, 8)

    # node score: sigmoid((x * weight).sum(-1)), fused into the same kernel.
    sc_ref[...] = jax.nn.sigmoid(
        jnp.sum(x3n * sw_ref[...], axis=-1, keepdims=True))    # (bz, roi, 1)


def _fcn_kernel(xf_ref, w1_ref, b1_ref, w2_ref, b2_ref, w3_ref, b3_ref, out_ref):
    """Fused 3-layer fcn head: Linear+LReLU, Linear+LReLU, Linear."""
    h = _leaky(jnp.dot(xf_ref[...], w1_ref[...],
                       preferred_element_type=jnp.float32) + b1_ref[...])
    h = _leaky(jnp.dot(h, w2_ref[...],
                       preferred_element_type=jnp.float32) + b2_ref[...])
    out_ref[...] = (jnp.dot(h, w3_ref[...],
                            preferred_element_type=jnp.float32) + b3_ref[...])


# ------------------------------------------------------------- parameters ---

def init_params(key, node_input_dim, roi_num):
    """PyTorch-layout parameters: Linear weights are (out, in)."""
    inner = roi_num
    l = int(roi_num * 0.7)
    shapes = {
        "gcn_w1": (inner, node_input_dim), "gcn_b1": (inner,),
        "gcn_w2": (inner, inner),          "gcn_b2": (inner,),
        "gcn1_w": (inner, inner),          "gcn1_b": (inner,),
        "gcn2_w1": (64, inner),            "gcn2_b1": (64,),
        "gcn2_w2": (8, 64),                "gcn2_b2": (8,),
        "fcn_w1": (256, 8 * l),            "fcn_b1": (256,),
        "fcn_w2": (32, 256),               "fcn_b2": (32,),
        "fcn_w3": (2, 32),                 "fcn_b3": (2,),
        "score_w": (1, 8),
    }
    params = {}
    keys = jax.random.split(key, len(shapes))
    for k, (name, shape) in zip(keys, shapes.items()):
        fan_in = shape[-1]
        bound = 1.0 / float(fan_in) ** 0.5
        params[name] = jax.random.uniform(
            k, shape, jnp.float32, minval=-bound, maxval=bound)
    # BatchNorm affine params (PyTorch defaults: gamma=1, beta=0).
    for bn in ("bn1", "bn2", "bn3"):
        params[bn + "_g"] = jnp.ones((inner,), jnp.float32)
        params[bn + "_b"] = jnp.zeros((inner,), jnp.float32)
    return params


def prepare_params(params):
    """One-time layout prep (hoisted out of the forward): pre-transpose Linear
    weights to (in, out) and reshape bias / norm / score vectors to
    broadcast-ready shapes so the kernels do zero layout work per call."""
    p = {
        "gcn_w1_t": params["gcn_w1"].T, "gcn_b1": params["gcn_b1"].reshape(1, -1),
        "gcn_w2_t": params["gcn_w2"].T, "gcn_b2": params["gcn_b2"].reshape(1, -1),
        "gcn1_w_t": params["gcn1_w"].T, "gcn1_b": params["gcn1_b"].reshape(1, -1),
        "gcn2_w1_t": params["gcn2_w1"].T, "gcn2_b1": params["gcn2_b1"].reshape(1, -1),
        "gcn2_w2_t": params["gcn2_w2"].T, "gcn2_b2": params["gcn2_b2"].reshape(1, -1),
        "bn1_g": params["bn1_g"].reshape(1, -1), "bn1_b": params["bn1_b"].reshape(1, -1),
        "bn2_g": params["bn2_g"].reshape(1, -1), "bn2_b": params["bn2_b"].reshape(1, -1),
        "bn3_g": params["bn3_g"].reshape(1, -1, 1),
        "bn3_b": params["bn3_b"].reshape(1, -1, 1),
        "score_w": params["score_w"].reshape(1, 1, -1),
        "fcn_w1_t": params["fcn_w1"].T, "fcn_b1": params["fcn_b1"].reshape(1, -1),
        "fcn_w2_t": params["fcn_w2"].T, "fcn_b2": params["fcn_b2"].reshape(1, -1),
        "fcn_w3_t": params["fcn_w3"].T, "fcn_b3": params["fcn_b3"].reshape(1, -1),
    }
    return jax.tree_util.tree_map(jnp.asarray, p)


# ----------------------------------------------------------------- forward ---

@jax.jit
def gcn_predictor_forward(prep, m, node_feature):
    bz, roi, _ = m.shape
    l = int(roi * 0.7)

    # Flatten batch*roi once outside the kernel (free layout-preserving view).
    m2 = m.reshape(bz * roi, roi)
    nf2 = node_feature.reshape(bz * roi, -1)

    x3, sc3 = pl.pallas_call(
        _gcn_blocks_kernel,
        out_shape=(jax.ShapeDtypeStruct((bz, roi, 8), jnp.float32),
                   jax.ShapeDtypeStruct((bz, roi, 1), jnp.float32)),
        in_specs=[_VMEM] * 19,
        out_specs=(_VMEM, _VMEM),
    )(m2, nf2,
      prep["gcn_w1_t"], prep["gcn_b1"], prep["gcn_w2_t"], prep["gcn_b2"],
      prep["bn1_g"], prep["bn1_b"],
      prep["gcn1_w_t"], prep["gcn1_b"], prep["bn2_g"], prep["bn2_b"],
      prep["gcn2_w1_t"], prep["gcn2_b1"], prep["gcn2_w2_t"], prep["gcn2_b2"],
      prep["bn3_g"], prep["bn3_b"],
      prep["score_w"])

    sc = sc3[:, :, 0]                                  # (bz, roi)

    # rank-based row selection (exact reference semantics: x[i, rank[i,:l], :]).
    # TODO(synk): sort/argsort has no clean Pallas TPU equivalent; kept as tiny
    # jitted XLA ops between the two kernels. jnp.argsort is stable while
    # torch.sort is not, so tie-broken orderings may differ on equal scores.
    idx = jnp.argsort(sc, axis=-1)                     # ascending, like torch.sort
    rank = jnp.argsort(idx, axis=-1)                   # inverse permutation
    sel = rank[:, :l]                                  # (bz, l)
    x_p = jnp.take_along_axis(x3, sel[:, :, None], axis=1)   # (bz, l, 8)
    xf = x_p.reshape(bz, 8 * l)                        # (bz, 8*l)

    out = pl.pallas_call(
        _fcn_kernel,
        out_shape=jax.ShapeDtypeStruct((bz, 2), jnp.float32),
        in_specs=[_VMEM] * 7,
        out_specs=_VMEM,
    )(xf, prep["fcn_w1_t"], prep["fcn_b1"], prep["fcn_w2_t"], prep["fcn_b2"],
      prep["fcn_w3_t"], prep["fcn_b3"])

    return out, sc


# -------------------------------------------------------------------- main ---

if __name__ == "__main__":
    bz, roi_num, node_input_dim = 2, 16, 32

    key = jax.random.PRNGKey(0)
    k_m, k_nf, k_p = jax.random.split(key, 3)
    m = jax.random.normal(k_m, (bz, roi_num, roi_num), jnp.float32)
    node_feature = jax.random.normal(
        k_nf, (bz, roi_num, node_input_dim), jnp.float32)

    params = init_params(k_p, node_input_dim, roi_num)
    prep = prepare_params(params)        # one-time weight transpose / reshape

    out, sc = gcn_predictor_forward(prep, m, node_feature)
    jax.block_until_ready((out, sc))

    assert out.shape == (bz, 2), out.shape
    assert sc.shape == (bz, roi_num), sc.shape
    assert jnp.all(jnp.isfinite(out)) and jnp.all(jnp.isfinite(sc))
    print("KERNEL_OK")
</pallas_src>

<mosaic_0001>
module attributes {stable_mosaic.version = 11 : i64} {
  func.func @_gcn_blocks_kernel(%arg0: memref<32x16xf32, #tpu.memory_space<vmem>>, %arg1: memref<32x32xf32, #tpu.memory_space<vmem>>, %arg2: memref<32x16xf32, #tpu.memory_space<vmem>>, %arg3: memref<1x16xf32, #tpu.memory_space<vmem>>, %arg4: memref<16x16xf32, #tpu.memory_space<vmem>>, %arg5: memref<1x16xf32, #tpu.memory_space<vmem>>, %arg6: memref<1x16xf32, #tpu.memory_space<vmem>>, %arg7: memref<1x16xf32, #tpu.memory_space<vmem>>, %arg8: memref<16x16xf32, #tpu.memory_space<vmem>>, %arg9: memref<1x16xf32, #tpu.memory_space<vmem>>, %arg10: memref<1x16xf32, #tpu.memory_space<vmem>>, %arg11: memref<1x16xf32, #tpu.memory_space<vmem>>, %arg12: memref<16x64xf32, #tpu.memory_space<vmem>>, %arg13: memref<1x64xf32, #tpu.memory_space<vmem>>, %arg14: memref<64x8xf32, #tpu.memory_space<vmem>>, %arg15: memref<1x8xf32, #tpu.memory_space<vmem>>, %arg16: memref<1x16x1xf32, #tpu.memory_space<vmem>>, %arg17: memref<1x16x1xf32, #tpu.memory_space<vmem>>, %arg18: memref<1x1x8xf32, #tpu.memory_space<vmem>>, %arg19: memref<2x16x8xf32, #tpu.memory_space<vmem>>, %arg20: memref<2x16x1xf32, #tpu.memory_space<vmem>>) attributes {dimension_semantics = [], scalar_prefetch = 0 : i64, scratch_operands = 0 : i64, tpu.core_type = #tpu.core_type<tc>} {
    %c0 = arith.constant 0 : index
    %c0_0 = arith.constant 0 : index
    %0 = vector.load %arg0[%c0, %c0_0] : memref<32x16xf32, #tpu.memory_space<vmem>>, vector<32x16xf32>
    %cst = arith.constant dense<0.000000e+00> : vector<32xf32>
    %1 = vector.multi_reduction <add>, %0, %cst [1] : vector<32x16xf32> to vector<32xf32>
    %2 = vector.shape_cast %1 : vector<32xf32> to vector<32x1xf32>
    %c0_1 = arith.constant 0 : index
    %c0_2 = arith.constant 0 : index
    %3 = vector.load %arg1[%c0_1, %c0_2] : memref<32x32xf32, #tpu.memory_space<vmem>>, vector<32x32xf32>
    %4 = vector.broadcast %2 : vector<32x1xf32> to vector<32x32xf32>
    %5 = arith.mulf %4, %3 : vector<32x32xf32>
    %c0_3 = arith.constant 0 : index
    %c0_4 = arith.constant 0 : index
    %6 = vector.load %arg2[%c0_3, %c0_4] : memref<32x16xf32, #tpu.memory_space<vmem>>, vector<32x16xf32>
    %cst_5 = arith.constant dense<0.000000e+00> : vector<32x16xf32>
    %7 = tpu.matmul %5, %6, %cst_5 {dimension_numbers = #tpu.dot_dimension_numbers<[1], [0], [0], [1], [0, 0, 1, 1], [], []>} : vector<32x32xf32>, vector<32x16xf32>, vector<32x16xf32> -> vector<32x16xf32>
    %c0_6 = arith.constant 0 : index
    %c0_7 = arith.constant 0 : index
    %8 = vector.load %arg3[%c0_6, %c0_7] : memref<1x16xf32, #tpu.memory_space<vmem>>, vector<1x16xf32>
    %9 = vector.broadcast %8 : vector<1x16xf32> to vector<32x16xf32>
    %10 = arith.addf %7, %9 : vector<32x16xf32>
    %cst_8 = arith.constant 0.000000e+00 : f32
    %11 = vector.broadcast %cst_8 : f32 to vector<32x16xf32>
    %12 = arith.cmpf oge, %10, %11 : vector<32x16xf32>
    %cst_9 = arith.constant 2.000000e-01 : f32
    %13 = vector.broadcast %cst_9 : f32 to vector<32x16xf32>
    %14 = arith.mulf %13, %10 : vector<32x16xf32>
    %15 = arith.select %12, %10, %14 : vector<32x16xi1>, vector<32x16xf32>
    %c0_10 = arith.constant 0 : index
    %c0_11 = arith.constant 0 : index
    %16 = vector.load %arg4[%c0_10, %c0_11] : memref<16x16xf32, #tpu.memory_space<vmem>>, vector<16x16xf32>
    %cst_12 = arith.constant dense<0.000000e+00> : vector<32x16xf32>
    %17 = tpu.matmul %15, %16, %cst_12 {dimension_numbers = #tpu.dot_dimension_numbers<[1], [0], [0], [1], [0, 0, 1, 1], [], []>} : vector<32x16xf32>, vector<16x16xf32>, vector<32x16xf32> -> vector<32x16xf32>
    %c0_13 = arith.constant 0 : index
    %c0_14 = arith.constant 0 : index
    %18 = vector.load %arg5[%c0_13, %c0_14] : memref<1x16xf32, #tpu.memory_space<vmem>>, vector<1x16xf32>
    %19 = vector.broadcast %18 : vector<1x16xf32> to vector<32x16xf32>
    %20 = arith.addf %17, %19 : vector<32x16xf32>
    %cst_15 = arith.constant dense<0.000000e+00> : vector<16xf32>
    %21 = vector.multi_reduction <add>, %20, %cst_15 [0] : vector<32x16xf32> to vector<16xf32>
    %22 = vector.shape_cast %21 : vector<16xf32> to vector<1x16xf32>
    %cst_16 = arith.constant 3.200000e+01 : f32
    %23 = vector.broadcast %cst_16 : f32 to vector<1x16xf32>
    %24 = arith.divf %22, %23 : vector<1x16xf32>
    %25 = vector.broadcast %24 : vector<1x16xf32> to vector<32x16xf32>
    %26 = arith.subf %20, %25 : vector<32x16xf32>
    %27 = arith.mulf %26, %26 : vector<32x16xf32>
    %cst_17 = arith.constant dense<0.000000e+00> : vector<16xf32>
    %28 = vector.multi_reduction <add>, %27, %cst_17 [0] : vector<32x16xf32> to vector<16xf32>
    %29 = vector.shape_cast %28 : vector<16xf32> to vector<1x16xf32>
    %cst_18 = arith.constant 3.200000e+01 : f32
    %30 = vector.broadcast %cst_18 : f32 to vector<1x16xf32>
    %31 = arith.divf %29, %30 : vector<1x16xf32>
    %32 = vector.broadcast %24 : vector<1x16xf32> to vector<32x16xf32>
    %33 = arith.subf %20, %32 : vector<32x16xf32>
    %cst_19 = arith.constant 9.99999974E-6 : f32
    %34 = vector.broadcast %cst_19 : f32 to vector<1x16xf32>
    %35 = arith.addf %31, %34 : vector<1x16xf32>
    %36 = math.rsqrt %35 : vector<1x16xf32>
    %37 = vector.broadcast %36 : vector<1x16xf32> to vector<32x16xf32>
    %38 = arith.mulf %33, %37 : vector<32x16xf32>
    %c0_20 = arith.constant 0 : index
    %c0_21 = arith.constant 0 : index
    %39 = vector.load %arg6[%c0_20, %c0_21] : memref<1x16xf32, #tpu.memory_space<vmem>>, vector<1x16xf32>
    %40 = vector.broadcast %39 : vector<1x16xf32> to vector<32x16xf32>
    %41 = arith.mulf %38, %40 : vector<32x16xf32>
    %c0_22 = arith.constant 0 : index
    %c0_23 = arith.constant 0 : index
    %42 = vector.load %arg7[%c0_22, %c0_23] : memref<1x16xf32, #tpu.memory_space<vmem>>, vector<1x16xf32>
    %43 = vector.broadcast %42 : vector<1x16xf32> to vector<32x16xf32>
    %44 = arith.addf %41, %43 : vector<32x16xf32>
    %45 = vector.broadcast %2 : vector<32x1xf32> to vector<32x16xf32>
    %46 = arith.mulf %45, %44 : vector<32x16xf32>
    %c0_24 = arith.constant 0 : index
    %c0_25 = arith.constant 0 : index
    %47 = vector.load %arg8[%c0_24, %c0_25] : memref<16x16xf32, #tpu.memory_space<vmem>>, vector<16x16xf32>
    %cst_26 = arith.constant dense<0.000000e+00> : vector<32x16xf32>
    %48 = tpu.matmul %46, %47, %cst_26 {dimension_numbers = #tpu.dot_dimension_numbers<[1], [0], [0], [1], [0, 0, 1, 1], [], []>} : vector<32x16xf32>, vector<16x16xf32>, vector<32x16xf32> -> vector<32x16xf32>
    %c0_27 = arith.constant 0 : index
    %c0_28 = arith.constant 0 : index
    %49 = vector.load %arg9[%c0_27, %c0_28] : memref<1x16xf32, #tpu.memory_space<vmem>>, vector<1x16xf32>
    %50 = vector.broadcast %49 : vector<1x16xf32> to vector<32x16xf32>
    %51 = arith.addf %48, %50 : vector<32x16xf32>
    %cst_29 = arith.constant 0.000000e+00 : f32
    %52 = vector.broadcast %cst_29 : f32 to vector<32x16xf32>
    %53 = arith.cmpf oge, %51, %52 : vector<32x16xf32>
    %cst_30 = arith.constant 2.000000e-01 : f32
    %54 = vector.broadcast %cst_30 : f32 to vector<32x16xf32>
    %55 = arith.mulf %54, %51 : vector<32x16xf32>
    %56 = arith.select %53, %51, %55 : vector<32x16xi1>, vector<32x16xf32>
    %cst_31 = arith.constant dense<0.000000e+00> : vector<16xf32>
    %57 = vector.multi_reduction <add>, %56, %cst_31 [0] : vector<32x16xf32> to vector<16xf32>
    %58 = vector.shape_cast %57 : vector<16xf32> to vector<1x16xf32>
    %cst_32 = arith.constant 3.200000e+01 : f32
    %59 = vector.broadcast %cst_32 : f32 to vector<1x16xf32>
    %60 = arith.divf %58, %59 : vector<1x16xf32>
    %61 = vector.broadcast %60 : vector<1x16xf32> to vector<32x16xf32>
    %62 = arith.subf %56, %61 : vector<32x16xf32>
    %63 = arith.mulf %62, %62 : vector<32x16xf32>
    %cst_33 = arith.constant dense<0.000000e+00> : vector<16xf32>
    %64 = vector.multi_reduction <add>, %63, %cst_33 [0] : vector<32x16xf32> to vector<16xf32>
    %65 = vector.shape_cast %64 : vector<16xf32> to vector<1x16xf32>
    %cst_34 = arith.constant 3.200000e+01 : f32
    %66 = vector.broadcast %cst_34 : f32 to vector<1x16xf32>
    %67 = arith.divf %65, %66 : vector<1x16xf32>
    %68 = vector.broadcast %60 : vector<1x16xf32> to vector<32x16xf32>
    %69 = arith.subf %56, %68 : vector<32x16xf32>
    %cst_35 = arith.constant 9.99999974E-6 : f32
    %70 = vector.broadcast %cst_35 : f32 to vector<1x16xf32>
    %71 = arith.addf %67, %70 : vector<1x16xf32>
    %72 = math.rsqrt %71 : vector<1x16xf32>
    %73 = vector.broadcast %72 : vector<1x16xf32> to vector<32x16xf32>
    %74 = arith.mulf %69, %73 : vector<32x16xf32>
    %c0_36 = arith.constant 0 : index
    %c0_37 = arith.constant 0 : index
    %75 = vector.load %arg10[%c0_36, %c0_37] : memref<1x16xf32, #tpu.memory_space<vmem>>, vector<1x16xf32>
    %76 = vector.broadcast %75 : vector<1x16xf32> to vector<32x16xf32>
    %77 = arith.mulf %74, %76 : vector<32x16xf32>
    %c0_38 = arith.constant 0 : index
    %c0_39 = arith.constant 0 : index
    %78 = vector.load %arg11[%c0_38, %c0_39] : memref<1x16xf32, #tpu.memory_space<vmem>>, vector<1x16xf32>
    %79 = vector.broadcast %78 : vector<1x16xf32> to vector<32x16xf32>
    %80 = arith.addf %77, %79 : vector<32x16xf32>
    %81 = vector.broadcast %2 : vector<32x1xf32> to vector<32x16xf32>
    %82 = arith.mulf %81, %80 : vector<32x16xf32>
    %c0_40 = arith.constant 0 : index
    %c0_41 = arith.constant 0 : index
    %83 = vector.load %arg12[%c0_40, %c0_41] : memref<16x64xf32, #tpu.memory_space<vmem>>, vector<16x64xf32>
    %cst_42 = arith.constant dense<0.000000e+00> : vector<32x64xf32>
    %84 = tpu.matmul %82, %83, %cst_42 {dimension_numbers = #tpu.dot_dimension_numbers<[1], [0], [0], [1], [0, 0, 1, 1], [], []>} : vector<32x16xf32>, vector<16x64xf32>, vector<32x64xf32> -> vector<32x64xf32>
    %c0_43 = arith.constant 0 : index
    %c0_44 = arith.constant 0 : index
    %85 = vector.load %arg13[%c0_43, %c0_44] : memref<1x64xf32, #tpu.memory_space<vmem>>, vector<1x64xf32>
    %86 = vector.broadcast %85 : vector<1x64xf32> to vector<32x64xf32>
    %87 = arith.addf %84, %86 : vector<32x64xf32>
    %cst_45 = arith.constant 0.000000e+00 : f32
    %88 = vector.broadcast %cst_45 : f32 to vector<32x64xf32>
    %89 = arith.cmpf oge, %87, %88 : vector<32x64xf32>
    %cst_46 = arith.constant 2.000000e-01 : f32
    %90 = vector.broadcast %cst_46 : f32 to vector<32x64xf32>
    %91 = arith.mulf %90, %87 : vector<32x64xf32>
    %92 = arith.select %89, %87, %91 : vector<32x64xi1>, vector<32x64xf32>
    %c0_47 = arith.constant 0 : index
    %c0_48 = arith.constant 0 : index
    %93 = vector.load %arg14[%c0_47, %c0_48] : memref<64x8xf32, #tpu.memory_space<vmem>>, vector<64x8xf32>
    %cst_49 = arith.constant dense<0.000000e+00> : vector<32x8xf32>
    %94 = tpu.matmul %92, %93, %cst_49 {dimension_numbers = #tpu.dot_dimension_numbers<[1], [0], [0], [1], [0, 0, 1, 1], [], []>} : vector<32x64xf32>, vector<64x8xf32>, vector<32x8xf32> -> vector<32x8xf32>
    %c0_50 = arith.constant 0 : index
    %c0_51 = arith.constant 0 : index
    %95 = vector.load %arg15[%c0_50, %c0_51] : memref<1x8xf32, #tpu.memory_space<vmem>>, vector<1x8xf32>
    %96 = vector.broadcast %95 : vector<1x8xf32> to vector<32x8xf32>
    %97 = arith.addf %94, %96 : vector<32x8xf32>
    %cst_52 = arith.constant 0.000000e+00 : f32
    %98 = vector.broadcast %cst_52 : f32 to vector<32x8xf32>
    %99 = arith.cmpf oge, %97, %98 : vector<32x8xf32>
    %cst_53 = arith.constant 2.000000e-01 : f32
    %100 = vector.broadcast %cst_53 : f32 to vector<32x8xf32>
    %101 = arith.mulf %100, %97 : vector<32x8xf32>
    %102 = arith.select %99, %97, %101 : vector<32x8xi1>, vector<32x8xf32>
    %103 = vector.shape_cast %102 : vector<32x8xf32> to vector<2x16x8xf32>
    %cst_54 = arith.constant dense<0.000000e+00> : vector<2x16xf32>
    %104 = vector.multi_reduction <add>, %103, %cst_54 [2] : vector<2x16x8xf32> to vector<2x16xf32>
    %105 = vector.shape_cast %104 : vector<2x16xf32> to vector<2x16x1xf32>
    %cst_55 = arith.constant dense<0.000000e+00> : vector<16x1xf32>
    %106 = vector.multi_reduction <add>, %105, %cst_55 [0] : vector<2x16x1xf32> to vector<16x1xf32>
    %107 = vector.shape_cast %106 : vector<16x1xf32> to vector<1x16x1xf32>
    %cst_56 = arith.constant 1.600000e+01 : f32
    %108 = vector.broadcast %cst_56 : f32 to vector<1x16x1xf32>
    %109 = arith.divf %107, %108 : vector<1x16x1xf32>
    %110 = vector.broadcast %109 : vector<1x16x1xf32> to vector<2x16x8xf32>
    %111 = arith.subf %103, %110 : vector<2x16x8xf32>
    %112 = arith.mulf %111, %111 : vector<2x16x8xf32>
    %cst_57 = arith.constant dense<0.000000e+00> : vector<2x16xf32>
    %113 = vector.multi_reduction <add>, %112, %cst_57 [2] : vector<2x16x8xf32> to vector<2x16xf32>
    %114 = vector.shape_cast %113 : vector<2x16xf32> to vector<2x16x1xf32>
    %cst_58 = arith.constant dense<0.000000e+00> : vector<16x1xf32>
    %115 = vector.multi_reduction <add>, %114, %cst_58 [0] : vector<2x16x1xf32> to vector<16x1xf32>
    %116 = vector.shape_cast %115 : vector<16x1xf32> to vector<1x16x1xf32>
    %cst_59 = arith.constant 1.600000e+01 : f32
    %117 = vector.broadcast %cst_59 : f32 to vector<1x16x1xf32>
    %118 = arith.divf %116, %117 : vector<1x16x1xf32>
    %cst_60 = arith.constant 9.99999974E-6 : f32
    %119 = vector.broadcast %cst_60 : f32 to vector<1x16x1xf32>
    %120 = arith.addf %118, %119 : vector<1x16x1xf32>
    %121 = math.rsqrt %120 : vector<1x16x1xf32>
    %122 = vector.broadcast %121 : vector<1x16x1xf32> to vector<2x16x8xf32>
    %123 = arith.mulf %111, %122 : vector<2x16x8xf32>
    %c0_61 = arith.constant 0 : index
    %c0_62 = arith.constant 0 : index
    %c0_63 = arith.constant 0 : index
    %124 = vector.load %arg16[%c0_61, %c0_62, %c0_63] : memref<1x16x1xf32, #tpu.memory_space<vmem>>, vector<1x16x1xf32>
    %125 = vector.broadcast %124 : vector<1x16x1xf32> to vector<2x16x8xf32>
    %126 = arith.mulf %123, %125 : vector<2x16x8xf32>
    %c0_64 = arith.constant 0 : index
    %c0_65 = arith.constant 0 : index
    %c0_66 = arith.constant 0 : index
    %127 = vector.load %arg17[%c0_64, %c0_65, %c0_66] : memref<1x16x1xf32, #tpu.memory_space<vmem>>, vector<1x16x1xf32>
    %128 = vector.broadcast %127 : vector<1x16x1xf32> to vector<2x16x8xf32>
    %129 = arith.addf %126, %128 : vector<2x16x8xf32>
    %c0_67 = arith.constant 0 : index
    %c0_68 = arith.constant 0 : index
    %c0_69 = arith.constant 0 : index
    %130 = vector.load %arg19[%c0_67, %c0_68, %c0_69] : memref<2x16x8xf32, #tpu.memory_space<vmem>>, vector<2x16x8xf32>
    tpu.vector_store %arg19[%c0_67, %c0_68, %c0_69], %129 {strides = array<i32>} : memref<2x16x8xf32, #tpu.memory_space<vmem>>, vector<2x16x8xf32>,
    %c0_70 = arith.constant 0 : index
    %c0_71 = arith.constant 0 : index
    %c0_72 = arith.constant 0 : index
    %131 = vector.load %arg18[%c0_70, %c0_71, %c0_72] : memref<1x1x8xf32, #tpu.memory_space<vmem>>, vector<1x1x8xf32>
    %132 = vector.broadcast %131 : vector<1x1x8xf32> to vector<2x16x8xf32>
    %133 = arith.mulf %129, %132 : vector<2x16x8xf32>
    %cst_73 = arith.constant dense<0.000000e+00> : vector<2x16xf32>
    %134 = vector.multi_reduction <add>, %133, %cst_73 [2] : vector<2x16x8xf32> to vector<2x16xf32>
    %135 = vector.shape_cast %134 : vector<2x16xf32> to vector<2x16x1xf32>
    %136 = arith.negf %135 : vector<2x16x1xf32>
    %137 = math.exp %136 : vector<2x16x1xf32>
    %cst_74 = arith.constant 1.000000e+00 : f32
    %138 = vector.broadcast %cst_74 : f32 to vector<2x16x1xf32>
    %139 = arith.addf %138, %137 : vector<2x16x1xf32>
    %140 = arith.divf %138, %139 : vector<2x16x1xf32>
    %c0_75 = arith.constant 0 : index
    %c0_76 = arith.constant 0 : index
    %c0_77 = arith.constant 0 : index
    %141 = vector.load %arg20[%c0_75, %c0_76, %c0_77] : memref<2x16x1xf32, #tpu.memory_space<vmem>>, vector<2x16x1xf32>
    tpu.vector_store %arg20[%c0_75, %c0_76, %c0_77], %140 {strides = array<i32>} : memref<2x16x1xf32, #tpu.memory_space<vmem>>, vector<2x16x1xf32>,
    return
  }
}

module attributes {stable_mosaic.version = 11 : i64} {
  func.func @_fcn_kernel(%arg0: memref<2x88xf32, #tpu.memory_space<vmem>>, %arg1: memref<88x256xf32, #tpu.memory_space<vmem>>, %arg2: memref<1x256xf32, #tpu.memory_space<vmem>>, %arg3: memref<256x32xf32, #tpu.memory_space<vmem>>, %arg4: memref<1x32xf32, #tpu.memory_space<vmem>>, %arg5: memref<32x2xf32, #tpu.memory_space<vmem>>, %arg6: memref<1x2xf32, #tpu.memory_space<vmem>>, %arg7: memref<2x2xf32, #tpu.memory_space<vmem>>) attributes {dimension_semantics = [], scalar_prefetch = 0 : i64, scratch_operands = 0 : i64, tpu.core_type = #tpu.core_type<tc>} {
    %c0 = arith.constant 0 : index
    %c0_0 = arith.constant 0 : index
    %0 = vector.load %arg0[%c0, %c0_0] : memref<2x88xf32, #tpu.memory_space<vmem>>, vector<2x88xf32>
    %c0_1 = arith.constant 0 : index
    %c0_2 = arith.constant 0 : index
    %1 = vector.load %arg1[%c0_1, %c0_2] : memref<88x256xf32, #tpu.memory_space<vmem>>, vector<88x256xf32>
    %cst = arith.constant dense<0.000000e+00> : vector<2x256xf32>
    %2 = tpu.matmul %0, %1, %cst {dimension_numbers = #tpu.dot_dimension_numbers<[1], [0], [0], [1], [0, 0, 1, 1], [], []>} : vector<2x88xf32>, vector<88x256xf32>, vector<2x256xf32> -> vector<2x256xf32>
    %c0_3 = arith.constant 0 : index
    %c0_4 = arith.constant 0 : index
    %3 = vector.load %arg2[%c0_3, %c0_4] : memref<1x256xf32, #tpu.memory_space<vmem>>, vector<1x256xf32>
    %4 = vector.broadcast %3 : vector<1x256xf32> to vector<2x256xf32>
    %5 = arith.addf %2, %4 : vector<2x256xf32>
    %cst_5 = arith.constant 0.000000e+00 : f32
    %6 = vector.broadcast %cst_5 : f32 to vector<2x256xf32>
    %7 = arith.cmpf oge, %5, %6 : vector<2x256xf32>
    %cst_6 = arith.constant 2.000000e-01 : f32
    %8 = vector.broadcast %cst_6 : f32 to vector<2x256xf32>
    %9 = arith.mulf %8, %5 : vector<2x256xf32>
    %10 = arith.select %7, %5, %9 : vector<2x256xi1>, vector<2x256xf32>
    %c0_7 = arith.constant 0 : index
    %c0_8 = arith.constant 0 : index
    %11 = vector.load %arg3[%c0_7, %c0_8] : memref<256x32xf32, #tpu.memory_space<vmem>>, vector<256x32xf32>
    %cst_9 = arith.constant dense<0.000000e+00> : vector<2x32xf32>
    %12 = tpu.matmul %10, %11, %cst_9 {dimension_numbers = #tpu.dot_dimension_numbers<[1], [0], [0], [1], [0, 0, 1, 1], [], []>} : vector<2x256xf32>, vector<256x32xf32>, vector<2x32xf32> -> vector<2x32xf32>
    %c0_10 = arith.constant 0 : index
    %c0_11 = arith.constant 0 : index
    %13 = vector.load %arg4[%c0_10, %c0_11] : memref<1x32xf32, #tpu.memory_space<vmem>>, vector<1x32xf32>
    %14 = vector.broadcast %13 : vector<1x32xf32> to vector<2x32xf32>
    %15 = arith.addf %12, %14 : vector<2x32xf32>
    %cst_12 = arith.constant 0.000000e+00 : f32
    %16 = vector.broadcast %cst_12 : f32 to vector<2x32xf32>
    %17 = arith.cmpf oge, %15, %16 : vector<2x32xf32>
    %cst_13 = arith.constant 2.000000e-01 : f32
    %18 = vector.broadcast %cst_13 : f32 to vector<2x32xf32>
    %19 = arith.mulf %18, %15 : vector<2x32xf32>
    %20 = arith.select %17, %15, %19 : vector<2x32xi1>, vector<2x32xf32>
    %c0_14 = arith.constant 0 : index
    %c0_15 = arith.constant 0 : index
    %21 = vector.load %arg5[%c0_14, %c0_15] : memref<32x2xf32, #tpu.memory_space<vmem>>, vector<32x2xf32>
    %cst_16 = arith.constant dense<0.000000e+00> : vector<2x2xf32>
    %22 = tpu.matmul %20, %21, %cst_16 {dimension_numbers = #tpu.dot_dimension_numbers<[1], [0], [0], [1], [0, 0, 1, 1], [], []>} : vector<2x32xf32>, vector<32x2xf32>, vector<2x2xf32> -> vector<2x2xf32>
    %c0_17 = arith.constant 0 : index
    %c0_18 = arith.constant 0 : index
    %23 = vector.load %arg6[%c0_17, %c0_18] : memref<1x2xf32, #tpu.memory_space<vmem>>, vector<1x2xf32>
    %24 = vector.broadcast %23 : vector<1x2xf32> to vector<2x2xf32>
    %25 = arith.addf %22, %24 : vector<2x2xf32>
    %c0_19 = arith.constant 0 : index
    %c0_20 = arith.constant 0 : index
    %26 = vector.load %arg7[%c0_19, %c0_20] : memref<2x2xf32, #tpu.memory_space<vmem>>, vector<2x2xf32>
    tpu.vector_store %arg7[%c0_19, %c0_20], %25 {strides = array<i32>} : memref<2x2xf32, #tpu.memory_space<vmem>>, vector<2x2xf32>,
    return
  }
}

</mosaic_0001>

<llo_original>
// kernel: gcn_predictor_forward.2
$region0: #{gcn_predictor_forward.2}
  #allocation0 [shape = 'u32[]', space=smem, size = 0x4, offset = 0x4, fixed_abs, tag = 'smem constant byte address 0x4 - core index']
  #allocation1 [shape = 'u32[72,128]{1,0:T(1,128)}', space=vmem, size = 0x9000, scoped, tag = 'internal scratch']
  %s0 = inlined_call_operand.vmem [shape: f32[32,16], index: 0, kind: input, shape index: {}]
  %s1 = inlined_call_operand.vmem [shape: f32[32,32], index: 1, kind: input, shape index: {}]
  %s2 = inlined_call_operand.vmem [shape: f32[32,16], index: 2, kind: input, shape index: {}]
  %s3 = inlined_call_operand.vmem [shape: f32[1,16], index: 3, kind: input, shape index: {}]
  %s4 = inlined_call_operand.vmem [shape: f32[16,16], index: 4, kind: input, shape index: {}]
  %s5 = inlined_call_operand.vmem [shape: f32[1,16], index: 5, kind: input, shape index: {}]
  %s6 = inlined_call_operand.vmem [shape: f32[1,16], index: 6, kind: input, shape index: {}]
  %s7 = inlined_call_operand.vmem [shape: f32[1,16], index: 7, kind: input, shape index: {}]
  %s8 = inlined_call_operand.vmem [shape: f32[16,16], index: 8, kind: input, shape index: {}]
  %s9 = inlined_call_operand.vmem [shape: f32[1,16], index: 9, kind: input, shape index: {}]
  %s10 = inlined_call_operand.vmem [shape: f32[1,16], index: 10, kind: input, shape index: {}]
  %s11 = inlined_call_operand.vmem [shape: f32[1,16], index: 11, kind: input, shape index: {}]
  %s12 = inlined_call_operand.vmem [shape: f32[16,64], index: 12, kind: input, shape index: {}]
  %s13 = inlined_call_operand.vmem [shape: f32[1,64], index: 13, kind: input, shape index: {}]
  %s14 = inlined_call_operand.vmem [shape: f32[64,8], index: 14, kind: input, shape index: {}]
  %s15 = inlined_call_operand.vmem [shape: f32[1,8], index: 15, kind: input, shape index: {}]
  %s16 = inlined_call_operand.vmem [shape: f32[1,16,1], index: 16, kind: input, shape index: {}]
  %s17 = inlined_call_operand.vmem [shape: f32[1,16,1], index: 17, kind: input, shape index: {}]
  %s18 = inlined_call_operand.vmem [shape: f32[1,1,8], index: 18, kind: input, shape index: {}]
  %s19 = inlined_call_operand.vmem [shape: f32[2,16,8], index: 19, kind: output, shape index: {0}]
  %s20 = inlined_call_operand.vmem [shape: f32[2,16,1], index: 20, kind: output, shape index: {1}]
  %21 = xla_tuple %s19, %s20
  %s22 = sld [smem:[#allocation0]]
  $region94: #{gcn_predictor_forward.2} parent=0
    _
  %s24 = ssub.s32 1, %s22
  %s25 = scalar_select 0, %s24, %s22
  // Predicated region
  $region2: #{gcn_predictor_forward.2} parent=0 // pred_check
    _
  $region3: #{gcn_predictor_forward.2} parent=0 // pred_check_branch
    %27 = sbr.rel (0) target = $region5
  $region4: #{gcn_predictor_forward.2} parent=0 // pred_region
    _
  $region5: #{gcn_predictor_forward.2} parent=0 // pred_fallthru
    _
  // Predicated region
  $region6: #{gcn_predictor_forward.2} parent=0 // pred_check
    _
  $region7: #{gcn_predictor_forward.2} parent=0 // pred_check_branch
    %29 = sbr.rel (0) target = $region9
  $region8: #{gcn_predictor_forward.2} parent=0 // pred_region
    _
  $region9: #{gcn_predictor_forward.2} parent=0 // pred_fallthru
    _
  // Predicated region
  $region10: #{gcn_predictor_forward.2} parent=0 // pred_check
    _
  $region11: #{gcn_predictor_forward.2} parent=0 // pred_check_branch
    %31 = sbr.rel (0) target = $region13
  $region12: #{gcn_predictor_forward.2} parent=0 // pred_region
    _
  $region13: #{gcn_predictor_forward.2} parent=0 // pred_fallthru
    _
  // Predicated region
  $region14: #{gcn_predictor_forward.2} parent=0 // pred_check
    _
  $region15: #{gcn_predictor_forward.2} parent=0 // pred_check_branch
    %33 = sbr.rel (0) target = $region17
  $region16: #{gcn_predictor_forward.2} parent=0 // pred_region
    _
  $region17: #{gcn_predictor_forward.2} parent=0 // pred_fallthru
    _
  // Predicated region
  $region18: #{gcn_predictor_forward.2} parent=0 // pred_check
    _
  $region19: #{gcn_predictor_forward.2} parent=0 // pred_check_branch
    %35 = sbr.rel (0) target = $region21
  $region20: #{gcn_predictor_forward.2} parent=0 // pred_region
    _
  $region21: #{gcn_predictor_forward.2} parent=0 // pred_fallthru
    _
  // Predicated region
  $region22: #{gcn_predictor_forward.2} parent=0 // pred_check
    _
  $region23: #{gcn_predictor_forward.2} parent=0 // pred_check_branch
    %37 = sbr.rel (0) target = $region25
  $region24: #{gcn_predictor_forward.2} parent=0 // pred_region
    _
  $region25: #{gcn_predictor_forward.2} parent=0 // pred_fallthru
    _
  // Predicated region
  $region26: #{gcn_predictor_forward.2} parent=0 // pred_check
    _
  $region27: #{gcn_predictor_forward.2} parent=0 // pred_check_branch
    %39 = sbr.rel (0) target = $region29
  $region28: #{gcn_predictor_forward.2} parent=0 // pred_region
    _
  $region29: #{gcn_predictor_forward.2} parent=0 // pred_fallthru
    _
  // Predicated region
  $region30: #{gcn_predictor_forward.2} parent=0 // pred_check
    _
  $region31: #{gcn_predictor_forward.2} parent=0 // pred_check_branch
    %41 = sbr.rel (0) target = $region33
  $region32: #{gcn_predictor_forward.2} parent=0 // pred_region
    _
  $region33: #{gcn_predictor_forward.2} parent=0 // pred_fallthru
    _
  // Predicated region
  $region34: #{gcn_predictor_forward.2} parent=0 // pred_check
    _
  $region35: #{gcn_predictor_forward.2} parent=0 // pred_check_branch
    %43 = sbr.rel (0) target = $region37
  $region36: #{gcn_predictor_forward.2} parent=0 // pred_region
    _
  $region37: #{gcn_predictor_forward.2} parent=0 // pred_fallthru
    _
  // Predicated region
  $region38: #{gcn_predictor_forward.2} parent=0 // pred_check
    _
  $region39: #{gcn_predictor_forward.2} parent=0 // pred_check_branch
    %45 = sbr.rel (0) target = $region41
  $region40: #{gcn_predictor_forward.2} parent=0 // pred_region
    _
  $region41: #{gcn_predictor_forward.2} parent=0 // pred_fallthru
    _
  // Predicated region
  $region42: #{gcn_predictor_forward.2} parent=0 // pred_check
    _
  $region43: #{gcn_predictor_forward.2} parent=0 // pred_check_branch
    %47 = sbr.rel (0) target = $region45
  $region44: #{gcn_predictor_forward.2} parent=0 // pred_region
    _
  $region45: #{gcn_predictor_forward.2} parent=0 // pred_fallthru
    _
  // Predicated region
  $region46: #{gcn_predictor_forward.2} parent=0 // pred_check
    _
  $region47: #{gcn_predictor_forward.2} parent=0 // pred_check_branch
    %49 = sbr.rel (0) target = $region49
  $region48: #{gcn_predictor_forward.2} parent=0 // pred_region
    _
  $region49: #{gcn_predictor_forward.2} parent=0 // pred_fallthru
    _
  // Predicated region
  $region50: #{gcn_predictor_forward.2} parent=0 // pred_check
    _
  $region51: #{gcn_predictor_forward.2} parent=0 // pred_check_branch
    %51 = sbr.rel (0) target = $region53
  $region52: #{gcn_predictor_forward.2} parent=0 // pred_region
    _
  $region53: #{gcn_predictor_forward.2} parent=0 // pred_fallthru
    _
  // Predicated region
  $region54: #{gcn_predictor_forward.2} parent=0 // pred_check
    _
  $region55: #{gcn_predictor_forward.2} parent=0 // pred_check_branch
    %53 = sbr.rel (0) target = $region57
  $region56: #{gcn_predictor_forward.2} parent=0 // pred_region
    _
  $region57: #{gcn_predictor_forward.2} parent=0 // pred_fallthru
    _
  // Predicated region
  $region58: #{gcn_predictor_forward.2} parent=0 // pred_check
    _
  $region59: #{gcn_predictor_forward.2} parent=0 // pred_check_branch
    %55 = sbr.rel (0) target = $region61
  $region60: #{gcn_predictor_forward.2} parent=0 // pred_region
    _
  $region61: #{gcn_predictor_forward.2} parent=0 // pred_fallthru
    _
  // Predicated region
  $region62: #{gcn_predictor_forward.2} parent=0 // pred_check
    _
  $region63: #{gcn_predictor_forward.2} parent=0 // pred_check_branch
    %57 = sbr.rel (0) target = $region65
  $region64: #{gcn_predictor_forward.2} parent=0 // pred_region
    _
  $region65: #{gcn_predictor_forward.2} parent=0 // pred_fallthru
    _
  // Predicated region
  $region66: #{gcn_predictor_forward.2} parent=0 // pred_check
    _
  $region67: #{gcn_predictor_forward.2} parent=0 // pred_check_branch
    %59 = sbr.rel (0) target = $region69
  $region68: #{gcn_predictor_forward.2} parent=0 // pred_region
    _
  $region69: #{gcn_predictor_forward.2} parent=0 // pred_fallthru
    _
  // Predicated region
  $region70: #{gcn_predictor_forward.2} parent=0 // pred_check
    _
  $region71: #{gcn_predictor_forward.2} parent=0 // pred_check_branch
    %61 = sbr.rel (0) target = $region73
  $region72: #{gcn_predictor_forward.2} parent=0 // pred_region
    _
  $region73: #{gcn_predictor_forward.2} parent=0 // pred_fallthru
    _
  // Predicated region
  $region74: #{gcn_predictor_forward.2} parent=0 // pred_check
    _
  $region75: #{gcn_predictor_forward.2} parent=0 // pred_check_branch
    %63 = sbr.rel (0) target = $region77
  $region76: #{gcn_predictor_forward.2} parent=0 // pred_region
    _
  $region77: #{gcn_predictor_forward.2} parent=0 // pred_fallthru
    _
  %v64 = vld [vmem:[%s0] sm:$0xff]
  %v65 = vld [vmem:[%s0 + $0x8] sm:$0xff]
  %v66 = vld [vmem:[%s0 + $0x10] sm:$0xff]
  %v67 = vld [vmem:[%s0 + $0x18] sm:$0xff]
  %vm68 = vcmask 130048
  %v69 = vsel %vm68, %v64, 0.0
  %70 = vadd.xlane.f32.xlu0 %v69
  %v71 = vpop.xlane.xlu0 %70
  %v72 = vsel %vm68, %v65, 0.0
  %73 = vadd.xlane.f32.xlu0 %v72
  %v74 = vpop.xlane.xlu0 %73
  %v75 = vsel %vm68, %v66, 0.0
  %76 = vadd.xlane.f32.xlu0 %v75
  %v77 = vpop.xlane.xlu0 %76
  %v78 = vsel %vm68, %v67, 0.0
  %79 = vadd.xlane.f32.xlu0 %v78
  %v80 = vpop.xlane.xlu0 %79
  %v81 = vld [vmem:[%s1] sm:$0xff]
  %v82 = vld [vmem:[%s1 + $0x8] sm:$0xff]
  %v83 = vld [vmem:[%s1 + $0x10] sm:$0xff]
  %v84 = vld [vmem:[%s1 + $0x18] sm:$0xff]
  %v85 = vmul.f32 %v71, %v81
  %v86 = vmul.f32 %v74, %v82
  %v87 = vmul.f32 %v77, %v83
  %v88 = vmul.f32 %v80, %v84
  %v89 = vld [vmem:[%s2] sm:$0xff]
  %v90 = vld [vmem:[%s2 + $0x8] sm:$0xff]
  %v91 = vld [vmem:[%s2 + $0x10] sm:$0xff]
  %v92 = vld [vmem:[%s2 + $0x18] sm:$0xff]
  %v93 = vld [vmem:[%s3] sm:$0x1]
  %v95 = vperm.slane %v93, 0
  %vm97 = vcmask 261120
  %v99 = vsel %vm97, %v85, 0
  %v102 = vsel %vm97, %v86, 0
  %v105 = vsel %vm97, %v87, 0
  %v108 = vsel %vm97, %v88, 0
  %110 = vmatpush.msra.mxu0 0.0
  %111 = vmatpush.msra.mxu0 0.0
  %112 = vmatpush.msra.mxu0 0.0
  %113 = vmatpush.msra.mxu0 0.0
  %114 = vmatpush.msra.mxu0 0.0
  %115 = vmatpush.msra.mxu0 0.0
  %116 = vmatpush.msra.mxu0 0.0
  %117 = vmatpush.msra.mxu0 0.0
  %118 = vmatpush.msra.mxu0 0.0
  %119 = vmatpush.msra.mxu0 0.0
  %120 = vmatpush.msra.mxu0 0.0
  %121 = vmatpush.msra.mxu0 0.0
  %122 = vmatpush.msra.mxu0 %v92
  %123 = vmatpush.msra.mxu0 %v91
  %124 = vmatpush.msra.mxu0 %v90
  %125 = vmatpush.msra.mxu0 %v89
  %126 = vmatmul.f32.gmra.mxu0 %v99
  %v127 = vpop.f32.mrf.mxu0
  %v128 = vadd.f32 %v95, %v127
  %129 = vmatmul.f32.gmra.mxu0 %v102
  %v130 = vpop.f32.mrf.mxu0
  %v131 = vadd.f32 %v95, %v130
  %132 = vmatmul.f32.gmra.mxu0 %v105
  %v133 = vpop.f32.mrf.mxu0
  %v134 = vadd.f32 %v95, %v133
  %135 = vmatmul.f32.gmra.mxu0 %v108
  %v136 = vpop.f32.mrf.mxu0
  %v137 = vadd.f32 %v95, %v136
  %138 = vdwg.mxu0
  %vm139 = vcmp.ge.f32.partialorder %v128, 0.0
  %vm140 = vcmp.ge.f32.partialorder %v131, 0.0
  %vm141 = vcmp.ge.f32.partialorder %v134, 0.0
  %vm142 = vcmp.ge.f32.partialorder %v137, 0.0
  %v143 = vmul.f32 %v128, 0.2
  %v144 = vmul.f32 %v131, 0.2
  %v145 = vmul.f32 %v134, 0.2
  %v146 = vmul.f32 %v137, 0.2
  %v147 = vsel %vm139, %v128, %v143
  %v148 = vsel %vm140, %v131, %v144
  %v149 = vsel %vm141, %v134, %v145
  %v150 = vsel %vm142, %v137, %v146
  %v151 = vld [vmem:[%s4] sm:$0xff]
  %v152 = vld [vmem:[%s4 + $0x8] sm:$0xff]
  %v153 = vld [vmem:[%s5] sm:$0x1]
  %v155 = vperm.slane %v153, 0
  %v158 = vsel %vm68, %v147, 0
  %v161 = vsel %vm68, %v148, 0
  %v164 = vsel %vm68, %v149, 0
  %v167 = vsel %vm68, %v150, 0
  %169 = vmatpush.msra.mxu0 0.0
  %170 = vmatpush.msra.mxu0 0.0
  %171 = vmatpush.msra.mxu0 0.0
  %172 = vmatpush.msra.mxu0 0.0
  %173 = vmatpush.msra.mxu0 0.0
  %174 = vmatpush.msra.mxu0 0.0
  %175 = vmatpush.msra.mxu0 0.0
  %176 = vmatpush.msra.mxu0 0.0
  %177 = vmatpush.msra.mxu0 0.0
  %178 = vmatpush.msra.mxu0 0.0
  %179 = vmatpush.msra.mxu0 0.0
  %180 = vmatpush.msra.mxu0 0.0
  %181 = vmatpush.msra.mxu0 0.0
  %182 = vmatpush.msra.mxu0 0.0
  %183 = vmatpush.msra.mxu0 %v152
  %184 = vmatpush.msra.mxu0 %v151
  %185 = vmatmul.f32.gmra.mxu0 %v158
  %v186 = vpop.f32.mrf.mxu0
  %v187 = vadd.f32 %v155, %v186
  %188 = vmatmul.f32.gmra.mxu0 %v161
  %v189 = vpop.f32.mrf.mxu0
  %v190 = vadd.f32 %v155, %v189
  %191 = vmatmul.f32.gmra.mxu0 %v164
  %v192 = vpop.f32.mrf.mxu0
  %v193 = vadd.f32 %v155, %v192
  %194 = vmatmul.f32.gmra.mxu0 %v167
  %v195 = vpop.f32.mrf.mxu0
  %v196 = vadd.f32 %v155, %v195
  %197 = vdwg.mxu0
  %v198 = vsel %vm68, %v187, 0.0
  %v199 = vsel %vm68, %v190, 0.0
  %v200 = vadd.f32 %v198, %v199
  %v201 = vsel %vm68, %v193, 0.0
  %v202 = vadd.f32 %v200, %v201
  %v203 = vsel %vm68, %v196, 0.0
  %v204 = vadd.f32 %v202, %v203
  %v205 = vrot.slane %v204, 4
  %v206 = vadd.f32 %v204, %v205
  %v207 = vrot.slane %v206, 2
  %v208 = vadd.f32 %v206, %v207
  %v209 = vrot.slane %v208, 1
  %v210 = vadd.f32 %v208, %v209
  %v211 = vrcp.pop 32.0
  %v212 = vmul.f32 32.0, %v211
  %v213 = vsub.f32 1.0, %v212
  %v214 = vmul.f32 %v211, %v213
  %v215 = vadd.f32 %v211, %v214
  %vm216 = vweird.f32 %v211
  %v217 = vsel %vm216, %v211, %v215
  %v218 = vmul.f32 %v210, %v217
  %v219 = vsub.f32 %v187, %v218
  %v220 = vsub.f32 %v190, %v218
  %v221 = vsub.f32 %v193, %v218
  %v222 = vsub.f32 %v196, %v218
  %v223 = vmul.f32 %v219, %v219
  %v224 = vmul.f32 %v220, %v220
  %v225 = vmul.f32 %v221, %v221
  %v226 = vmul.f32 %v222, %v222
  %v227 = vsel %vm68, %v223, 0.0
  %v228 = vsel %vm68, %v224, 0.0
  %v229 = vadd.f32 %v227, %v228
  %v230 = vsel %vm68, %v225, 0.0
  %v231 = vadd.f32 %v229, %v230
  %v232 = vsel %vm68, %v226, 0.0
  %v233 = vadd.f32 %v231, %v232
  %v234 = vrot.slane %v233, 4
  %v235 = vadd.f32 %v233, %v234
  %v236 = vrot.slane %v235, 2
  %v237 = vadd.f32 %v235, %v236
  %v238 = vrot.slane %v237, 1
  %v239 = vadd.f32 %v237, %v238
  %v240 = vmul.f32 %v239, %v217
  %v241 = vadd.f32 %v240, 1e-05
  %v242 = vrsqrt.pop %v241
  %v243 = vmul.f32 %v242, %v241
  %v244 = vmul.f32 %v243, %v242
  %v245 = vmul.f32 0.5, %v244
  %v246 = vsub.f32 1.5, %v245
  %v247 = vmul.f32 %v242, %v246
  %vm248 = vweird.f32 %v241
  %vm249 = vweird.f32 %v242
  %vm250 = vmor %vm248, %vm249
  %v251 = vsel %vm250, %v242, %v247
  %v252 = vmul.f32 %v219, %v251
  %v253 = vmul.f32 %v220, %v251
  %v254 = vmul.f32 %v221, %v251
  %v255 = vmul.f32 %v222, %v251
  %v256 = vld [vmem:[%s6] sm:$0x1]
  %v258 = vperm.slane %v256, 0
  %v260 = vmul.f32 %v252, %v258
  %v261 = vmul.f32 %v253, %v258
  %v262 = vmul.f32 %v254, %v258
  %v263 = vmul.f32 %v255, %v258
  %v264 = vld [vmem:[%s7] sm:$0x1]
  %v266 = vperm.slane %v264, 0
  %v268 = vadd.f32 %v260, %v266
  %v269 = vadd.f32 %v261, %v266
  %v270 = vadd.f32 %v262, %v266
  %v271 = vadd.f32 %v263, %v266
  %v272 = vmul.f32 %v71, %v268
  %v273 = vmul.f32 %v74, %v269
  %v274 = vmul.f32 %v77, %v270
  %v275 = vmul.f32 %v80, %v271
  %v276 = vld [vmem:[%s8] sm:$0xff]
  %v277 = vld [vmem:[%s8 + $0x8] sm:$0xff]
  %v278 = vld [vmem:[%s9] sm:$0x1]
  %v280 = vperm.slane %v278, 0
  %v283 = vsel %vm68, %v272, 0
  %v286 = vsel %vm68, %v273, 0
  %v289 = vsel %vm68, %v274, 0
  %v292 = vsel %vm68, %v275, 0
  %294 = vmatpush.msra.mxu0 0.0
  %295 = vmatpush.msra.mxu0 0.0
  %296 = vmatpush.msra.mxu0 0.0
  %297 = vmatpush.msra.mxu0 0.0
  %298 = vmatpush.msra.mxu0 0.0
  %299 = vmatpush.msra.mxu0 0.0
  %300 = vmatpush.msra.mxu0 0.0
  %301 = vmatpush.msra.mxu0 0.0
  %302 = vmatpush.msra.mxu0 0.0
  %303 = vmatpush.msra.mxu0 0.0
  %304 = vmatpush.msra.mxu0 0.0
  %305 = vmatpush.msra.mxu0 0.0
  %306 = vmatpush.msra.mxu0 0.0
  %307 = vmatpush.msra.mxu0 0.0
  %308 = vmatpush.msra.mxu0 %v277
  %309 = vmatpush.msra.mxu0 %v276
  %310 = vmatmul.f32.gmra.mxu0 %v283
  %v311 = vpop.f32.mrf.mxu0
  %v312 = vadd.f32 %v280, %v311
  %313 = vmatmul.f32.gmra.mxu0 %v286
  %v314 = vpop.f32.mrf.mxu0
  %v315 = vadd.f32 %v280, %v314
  %316 = vmatmul.f32.gmra.mxu0 %v289
  %v317 = vpop.f32.mrf.mxu0
  %v318 = vadd.f32 %v280, %v317
  %319 = vmatmul.f32.gmra.mxu0 %v292
  %v320 = vpop.f32.mrf.mxu0
  %v321 = vadd.f32 %v280, %v320
  %322 = vdwg.mxu0
  %vm323 = vcmp.ge.f32.partialorder %v312, 0.0
  %vm324 = vcmp.ge.f32.partialorder %v315, 0.0
  %vm325 = vcmp.ge.f32.partialorder %v318, 0.0
  %vm326 = vcmp.ge.f32.partialorder %v321, 0.0
  %v327 = vmul.f32 %v312, 0.2
  %v328 = vmul.f32 %v315, 0.2
  %v329 = vmul.f32 %v318, 0.2
  %v330 = vmul.f32 %v321, 0.2
  %v331 = vsel %vm323, %v312, %v327
  %v332 = vsel %vm324, %v315, %v328
  %v333 = vsel %vm325, %v318, %v329
  %v334 = vsel %vm326, %v321, %v330
  %v335 = vsel %vm68, %v331, 0.0
  %v336 = vsel %vm68, %v332, 0.0
  %v337 = vadd.f32 %v335, %v336
  %v338 = vsel %vm68, %v333, 0.0
  %v339 = vadd.f32 %v337, %v338
  %v340 = vsel %vm68, %v334, 0.0
  %v341 = vadd.f32 %v339, %v340
  %v342 = vrot.slane %v341, 4
  %v343 = vadd.f32 %v341, %v342
  %v344 = vrot.slane %v343, 2
  %v345 = vadd.f32 %v343, %v344
  %v346 = vrot.slane %v345, 1
  %v347 = vadd.f32 %v345, %v346
  %v348 = vmul.f32 %v347, %v217
  %v349 = vsub.f32 %v331, %v348
  %v350 = vsub.f32 %v332, %v348
  %v351 = vsub.f32 %v333, %v348
  %v352 = vsub.f32 %v334, %v348
  %v353 = vmul.f32 %v349, %v349
  %v354 = vmul.f32 %v350, %v350
  %v355 = vmul.f32 %v351, %v351
  %v356 = vmul.f32 %v352, %v352
  %v357 = vsel %vm68, %v353, 0.0
  %v358 = vsel %vm68, %v354, 0.0
  %v359 = vadd.f32 %v357, %v358
  %v360 = vsel %vm68, %v355, 0.0
  %v361 = vadd.f32 %v359, %v360
  %v362 = vsel %vm68, %v356, 0.0
  %v363 = vadd.f32 %v361, %v362
  %v364 = vrot.slane %v363, 4
  %v365 = vadd.f32 %v363, %v364
  %v366 = vrot.slane %v365, 2
  %v367 = vadd.f32 %v365, %v366
  %v368 = vrot.slane %v367, 1
  %v369 = vadd.f32 %v367, %v368
  %v370 = vmul.f32 %v369, %v217
  %v371 = vadd.f32 %v370, 1e-05
  %v372 = vrsqrt.pop %v371
  %v373 = vmul.f32 %v372, %v371
  %v374 = vmul.f32 %v373, %v372
  %v375 = vmul.f32 0.5, %v374
  %v376 = vsub.f32 1.5, %v375
  %v377 = vmul.f32 %v372, %v376
  %vm378 = vweird.f32 %v371
  %vm379 = vweird.f32 %v372
  %vm380 = vmor %vm378, %vm379
  %v381 = vsel %vm380, %v372, %v377
  %v382 = vmul.f32 %v349, %v381
  %v383 = vmul.f32 %v350, %v381
  %v384 = vmul.f32 %v351, %v381
  %v385 = vmul.f32 %v352, %v381
  %v386 = vld [vmem:[%s10] sm:$0x1]
  %v388 = vperm.slane %v386, 0
  %v390 = vmul.f32 %v382, %v388
  %v391 = vmul.f32 %v383, %v388
  %v392 = vmul.f32 %v384, %v388
  %v393 = vmul.f32 %v385, %v388
  %v394 = vld [vmem:[%s11] sm:$0x1]
  %v396 = vperm.slane %v394, 0
  %v398 = vadd.f32 %v390, %v396
  %v399 = vadd.f32 %v391, %v396
  %v400 = vadd.f32 %v392, %v396
  %v401 = vadd.f32 %v393, %v396
  %v402 = vmul.f32 %v71, %v398
  %v403 = vmul.f32 %v74, %v399
  %v404 = vmul.f32 %v77, %v400
  %v405 = vmul.f32 %v80, %v401
  %v406 = vld [vmem:[%s12] sm:$0xff]
  %v407 = vld [vmem:[%s12 + $0x8] sm:$0xff]
  %v408 = vld [vmem:[%s13] sm:$0x1]
  %v410 = vperm.slane %v408, 0
  %v413 = vsel %vm68, %v402, 0
  %v416 = vsel %vm68, %v403, 0
  %v419 = vsel %vm68, %v404, 0
  %v422 = vsel %vm68, %v405, 0
  %424 = vmatpush.msra.mxu0 0.0
  %425 = vmatpush.msra.mxu0 0.0
  %426 = vmatpush.msra.mxu0 0.0
  %427 = vmatpush.msra.mxu0 0.0
  %428 = vmatpush.msra.mxu0 0.0
  %429 = vmatpush.msra.mxu0 0.0
  %430 = vmatpush.msra.mxu0 0.0
  %431 = vmatpush.msra.mxu0 0.0
  %432 = vmatpush.msra.mxu0 0.0
  %433 = vmatpush.msra.mxu0 0.0
  %434 = vmatpush.msra.mxu0 0.0
  %435 = vmatpush.msra.mxu0 0.0
  %436 = vmatpush.msra.mxu0 0.0
  %437 = vmatpush.msra.mxu0 0.0
  %438 = vmatpush.msra.mxu0 %v407
  %439 = vmatpush.msra.mxu0 %v406
  %440 = vmatmul.f32.gmra.mxu0 %v413
  %v441 = vpop.f32.mrf.mxu0
  %v442 = vadd.f32 %v410, %v441
  %443 = vmatmul.f32.gmra.mxu0 %v416
  %v444 = vpop.f32.mrf.mxu0
  %v445 = vadd.f32 %v410, %v444
  %446 = vmatmul.f32.gmra.mxu0 %v419
  %v447 = vpop.f32.mrf.mxu0
  %v448 = vadd.f32 %v410, %v447
  %449 = vmatmul.f32.gmra.mxu0 %v422
  %v450 = vpop.f32.mrf.mxu0
  %v451 = vadd.f32 %v410, %v450
  %452 = vdwg.mxu0
  %vm453 = vcmp.ge.f32.partialorder %v442, 0.0
  %vm454 = vcmp.ge.f32.partialorder %v445, 0.0
  %vm455 = vcmp.ge.f32.partialorder %v448, 0.0
  %vm456 = vcmp.ge.f32.partialorder %v451, 0.0
  %v457 = vmul.f32 %v442, 0.2
  %v458 = vmul.f32 %v445, 0.2
  %v459 = vmul.f32 %v448, 0.2
  %v460 = vmul.f32 %v451, 0.2
  %v461 = vsel %vm453, %v442, %v457
  %v462 = vsel %vm454, %v445, %v458
  %v463 = vsel %vm455, %v448, %v459
  %v464 = vsel %vm456, %v451, %v460
  %v465 = vld [vmem:[%s14] sm:$0xff]
  %v466 = vld [vmem:[%s14 + $0x8] sm:$0xff]
  %v467 = vld [vmem:[%s14 + $0x10] sm:$0xff]
  %v468 = vld [vmem:[%s14 + $0x18] sm:$0xff]
  %v469 = vld [vmem:[%s14 + $0x20] sm:$0xff]
  %v470 = vld [vmem:[%s14 + $0x28] sm:$0xff]
  %v471 = vld [vmem:[%s14 + $0x30] sm:$0xff]
  %v472 = vld [vmem:[%s14 + $0x38] sm:$0xff]
  %v473 = vld [vmem:[%s15] sm:$0x1]
  %v475 = vperm.slane %v473, 0
  %vm477 = vcmask 523264
  %v479 = vsel %vm477, %v461, 0
  %v482 = vsel %vm477, %v462, 0
  %v485 = vsel %vm477, %v463, 0
  %v488 = vsel %vm477, %v464, 0
  %490 = vmatpush.msra.mxu0 0.0
  %491 = vmatpush.msra.mxu0 0.0
  %492 = vmatpush.msra.mxu0 0.0
  %493 = vmatpush.msra.mxu0 0.0
  %494 = vmatpush.msra.mxu0 0.0
  %495 = vmatpush.msra.mxu0 0.0
  %496 = vmatpush.msra.mxu0 0.0
  %497 = vmatpush.msra.mxu0 0.0
  %498 = vmatpush.msra.mxu0 %v472
  %499 = vmatpush.msra.mxu0 %v471
  %500 = vmatpush.msra.mxu0 %v470
  %501 = vmatpush.msra.mxu0 %v469
  %502 = vmatpush.msra.mxu0 %v468
  %503 = vmatpush.msra.mxu0 %v467
  %504 = vmatpush.msra.mxu0 %v466
  %505 = vmatpush.msra.mxu0 %v465
  %506 = vmatmul.f32.gmra.mxu0 %v479
  %v507 = vpop.f32.mrf.mxu0
  %v508 = vadd.f32 %v475, %v507
  %509 = vmatmul.f32.gmra.mxu0 %v482
  %v510 = vpop.f32.mrf.mxu0
  %v511 = vadd.f32 %v475, %v510
  %512 = vmatmul.f32.gmra.mxu0 %v485
  %v513 = vpop.f32.mrf.mxu0
  %v514 = vadd.f32 %v475, %v513
  %515 = vmatmul.f32.gmra.mxu0 %v488
  %v516 = vpop.f32.mrf.mxu0
  %v517 = vadd.f32 %v475, %v516
  %518 = vdwg.mxu0
  %vm519 = vcmp.ge.f32.partialorder %v508, 0.0
  %vm520 = vcmp.ge.f32.partialorder %v511, 0.0
  %vm521 = vcmp.ge.f32.partialorder %v514, 0.0
  %vm522 = vcmp.ge.f32.partialorder %v517, 0.0
  %v523 = vmul.f32 %v508, 0.2
  %v524 = vmul.f32 %v511, 0.2
  %v525 = vmul.f32 %v514, 0.2
  %v526 = vmul.f32 %v517, 0.2
  %v527 = vsel %vm519, %v508, %v523
  %v528 = vsel %vm520, %v511, %v524
  %v529 = vsel %vm521, %v514, %v525
  %v530 = vsel %vm522, %v517, %v526
  %vm531 = vcmask 64512
  %v532 = vsel %vm531, %v527, 0.0
  %533 = vadd.xlane.f32.xlu0 %v532
  %v534 = vpop.xlane.xlu0 %533
  %v535 = vsel %vm531, %v528, 0.0
  %536 = vadd.xlane.f32.xlu0 %v535
  %v537 = vpop.xlane.xlu0 %536
  %v538 = vsel %vm531, %v529, 0.0
  %539 = vadd.xlane.f32.xlu0 %v538
  %v540 = vpop.xlane.xlu0 %539
  %v541 = vsel %vm531, %v530, 0.0
  %542 = vadd.xlane.f32.xlu0 %v541
  %v543 = vpop.xlane.xlu0 %542
  %v544 = vadd.f32 %v534, %v540
  %v545 = vadd.f32 %v537, %v543
  %v546 = vrcp.pop 16.0
  %v547 = vmul.f32 16.0, %v546
  %v548 = vsub.f32 1.0, %v547
  %v549 = vmul.f32 %v546, %v548
  %v550 = vadd.f32 %v546, %v549
  %vm551 = vweird.f32 %v546
  %v552 = vsel %vm551, %v546, %v550
  %v553 = vmul.f32 %v544, %v552
  %v554 = vmul.f32 %v545, %v552
  %v555 = vsub.f32 %v527, %v553
  %v556 = vsub.f32 %v528, %v554
  %v557 = vsub.f32 %v529, %v553
  %v558 = vsub.f32 %v530, %v554
  %v559 = vmul.f32 %v555, %v555
  %v560 = vmul.f32 %v556, %v556
  %v561 = vmul.f32 %v557, %v557
  %v562 = vmul.f32 %v558, %v558
  %v563 = vsel %vm531, %v559, 0.0
  %564 = vadd.xlane.f32.xlu0 %v563
  %v565 = vpop.xlane.xlu0 %564
  %v566 = vsel %vm531, %v560, 0.0
  %567 = vadd.xlane.f32.xlu0 %v566
  %v568 = vpop.xlane.xlu0 %567
  %v569 = vsel %vm531, %v561, 0.0
  %570 = vadd.xlane.f32.xlu0 %v569
  %v571 = vpop.xlane.xlu0 %570
  %v572 = vsel %vm531, %v562, 0.0
  %573 = vadd.xlane.f32.xlu0 %v572
  %v574 = vpop.xlane.xlu0 %573
  %v575 = vadd.f32 %v565, %v571
  %v576 = vadd.f32 %v568, %v574
  %v577 = vmul.f32 %v575, %v552
  %v578 = vmul.f32 %v576, %v552
  %v579 = vadd.f32 %v577, 1e-05
  %v580 = vadd.f32 %v578, 1e-05
  %v581 = vrsqrt.pop %v579
  %v582 = vmul.f32 %v581, %v579
  %v583 = vmul.f32 %v582, %v581
  %v584 = vmul.f32 0.5, %v583
  %v585 = vsub.f32 1.5, %v584
  %v586 = vmul.f32 %v581, %v585
  %vm587 = vweird.f32 %v579
  %vm588 = vweird.f32 %v581
  %vm589 = vmor %vm587, %vm588
  %v590 = vsel %vm589, %v581, %v586
  %v591 = vrsqrt.pop %v580
  %v592 = vmul.f32 %v591, %v580
  %v593 = vmul.f32 %v592, %v591
  %v594 = vmul.f32 0.5, %v593
  %v595 = vsub.f32 1.5, %v594
  %v596 = vmul.f32 %v591, %v595
  %vm597 = vweird.f32 %v580
  %vm598 = vweird.f32 %v591
  %vm599 = vmor %vm597, %vm598
  %v600 = vsel %vm599, %v591, %v596
  %v601 = vmul.f32 %v555, %v590
  %v602 = vmul.f32 %v556, %v600
  %v603 = vmul.f32 %v557, %v590
  %v604 = vmul.f32 %v558, %v600
  %v605 = vld [vmem:[%s16] sm:$0xff]
  %v606 = vld [vmem:[%s16 + $0x8] sm:$0xff]
  %608 = vset.pattern.permute.xlu0 0
  %609 = vperm.xlu0 %608, %v605
  %v610 = vpop.permute.xlu0 %609
  %613 = vset.pattern.permute.xlu0 0
  %614 = vperm.xlu0 %613, %v606
  %v615 = vpop.permute.xlu0 %614
  %v617 = vmul.f32 %v601, %v610
  %v618 = vmul.f32 %v602, %v615
  %v619 = vmul.f32 %v603, %v610
  %v620 = vmul.f32 %v604, %v615
  %v621 = vld [vmem:[%s17] sm:$0xff]
  %v622 = vld [vmem:[%s17 + $0x8] sm:$0xff]
  %624 = vset.pattern.permute.xlu0 0
  %625 = vperm.xlu0 %624, %v621
  %v626 = vpop.permute.xlu0 %625
  %629 = vset.pattern.permute.xlu0 0
  %630 = vperm.xlu0 %629, %v622
  %v631 = vpop.permute.xlu0 %630
  %v633 = vadd.f32 %v617, %v626
  %v634 = vadd.f32 %v618, %v631
  %v635 = vadd.f32 %v619, %v626
  %v636 = vadd.f32 %v620, %v631
  %637 = vst.msk [vmem:[%s19] sm:$0xff] %vm531, %v633
  %638 = vst.msk [vmem:[%s19 + $0x8] sm:$0xff] %vm531, %v634
  %639 = vst.msk [vmem:[%s19 + $0x10] sm:$0xff] %vm531, %v635
  %640 = vst.msk [vmem:[%s19 + $0x18] sm:$0xff] %vm531, %v636
  %v641 = vld [vmem:[%s18] sm:$0x1]
  %v643 = vperm.slane %v641, 0
  %v645 = vmul.f32 %v633, %v643
  %v646 = vmul.f32 %v634, %v643
  %v647 = vmul.f32 %v635, %v643
  %v648 = vmul.f32 %v636, %v643
  %v649 = vsel %vm531, %v645, 0.0
  %650 = vadd.xlane.f32.xlu0 %v649
  %v651 = vpop.xlane.xlu0 %650
  %v652 = vsel %vm531, %v646, 0.0
  %653 = vadd.xlane.f32.xlu0 %v652
  %v654 = vpop.xlane.xlu0 %653
  %v655 = vsel %vm531, %v647, 0.0
  %656 = vadd.xlane.f32.xlu0 %v655
  %v657 = vpop.xlane.xlu0 %656
  %v658 = vsel %vm531, %v648, 0.0
  %659 = vadd.xlane.f32.xlu0 %v658
  %v660 = vpop.xlane.xlu0 %659
  %v661 = vxor.u32 %v651, 2147483648
  %v662 = vxor.u32 %v654, 2147483648
  %v663 = vxor.u32 %v657, 2147483648
  %v664 = vxor.u32 %v660, 2147483648
  %v665 = vmul.f32 %v661, 1.442695
  %v666 = vpow.pop %v665
  %v667 = vmul.f32 %v662, 1.442695
  %v668 = vpow.pop %v667
  %v669 = vmul.f32 %v663, 1.442695
  %v670 = vpow.pop %v669
  %v671 = vmul.f32 %v664, 1.442695
  %v672 = vpow.pop %v671
  %v673 = vadd.f32 %v666, 1.0
  %v674 = vadd.f32 %v668, 1.0
  %v675 = vadd.f32 %v670, 1.0
  %v676 = vadd.f32 %v672, 1.0
  %v677 = vrcp.pop %v673
  %v678 = vmul.f32 %v673, %v677
  %v679 = vsub.f32 1.0, %v678
  %v680 = vmul.f32 %v677, %v679
  %v681 = vadd.f32 %v677, %v680
  %vm682 = vweird.f32 %v673
  %vm683 = vweird.f32 %v677
  %vm684 = vmor %vm682, %vm683
  %v685 = vsel %vm684, %v677, %v681
  %v686 = vand.u32 2147483647, %v673
  %vm687 = vcmp.eq.f32.partialorder %v686, 8.507059e+37
  %v688 = vand.u32 %v673, 2147483648
  %v689 = vor.u32 1.1754944e-38, %v688
  %v690 = vsel %vm687, %v689, %v685
  %v691 = vmul.f32 1.0, %v690
  %v692 = vrcp.pop %v674
  %v693 = vmul.f32 %v674, %v692
  %v694 = vsub.f32 1.0, %v693
  %v695 = vmul.f32 %v692, %v694
  %v696 = vadd.f32 %v692, %v695
  %vm697 = vweird.f32 %v674
  %vm698 = vweird.f32 %v692
  %vm699 = vmor %vm697, %vm698
  %v700 = vsel %vm699, %v692, %v696
  %v701 = vand.u32 2147483647, %v674
  %vm702 = vcmp.eq.f32.partialorder %v701, 8.507059e+37
  %v703 = vand.u32 %v674, 2147483648
  %v704 = vor.u32 1.1754944e-38, %v703
  %v705 = vsel %vm702, %v704, %v700
  %v706 = vmul.f32 1.0, %v705
  %v707 = vrcp.pop %v675
  %v708 = vmul.f32 %v675, %v707
  %v709 = vsub.f32 1.0, %v708
  %v710 = vmul.f32 %v707, %v709
  %v711 = vadd.f32 %v707, %v710
  %vm712 = vweird.f32 %v675
  %vm713 = vweird.f32 %v707
  %vm714 = vmor %vm712, %vm713
  %v715 = vsel %vm714, %v707, %v711
  %v716 = vand.u32 2147483647, %v675
  %vm717 = vcmp.eq.f32.partialorder %v716, 8.507059e+37
  %v718 = vand.u32 %v675, 2147483648
  %v719 = vor.u32 1.1754944e-38, %v718
  %v720 = vsel %vm717, %v719, %v715
  %v721 = vmul.f32 1.0, %v720
  %v722 = vrcp.pop %v676
  %v723 = vmul.f32 %v676, %v722
  %v724 = vsub.f32 1.0, %v723
  %v725 = vmul.f32 %v722, %v724
  %v726 = vadd.f32 %v722, %v725
  %vm727 = vweird.f32 %v676
  %vm728 = vweird.f32 %v722
  %vm729 = vmor %vm727, %vm728
  %v730 = vsel %vm729, %v722, %v726
  %v731 = vand.u32 2147483647, %v676
  %vm732 = vcmp.eq.f32.partialorder %v731, 8.507059e+37
  %v733 = vand.u32 %v676, 2147483648
  %v734 = vor.u32 1.1754944e-38, %v733
  %v735 = vsel %vm732, %v734, %v730
  %v736 = vmul.f32 1.0, %v735
  %vm737 = vcmask 7168
  %738 = vst.msk [vmem:[%s20] sm:$0xff] %vm737, %v691
  %739 = vst.msk [vmem:[%s20 + $0x8] sm:$0xff] %vm737, %v706
  %740 = vst.msk [vmem:[%s20 + $0x10] sm:$0xff] %vm737, %v721
  %741 = vst.msk [vmem:[%s20 + $0x18] sm:$0xff] %vm737, %v736
  // Predicated region
  $region78: #{gcn_predictor_forward.2} parent=0 // pred_check
    _
  $region79: #{gcn_predictor_forward.2} parent=0 // pred_check_branch
    %743 = sbr.rel (0) target = $region81
  $region80: #{gcn_predictor_forward.2} parent=0 // pred_region
    _
  $region81: #{gcn_predictor_forward.2} parent=0 // pred_fallthru
    _
  // Predicated region
  $region82: #{gcn_predictor_forward.2} parent=0 // pred_check
    _
  $region83: #{gcn_predictor_forward.2} parent=0 // pred_check_branch
    %745 = sbr.rel (0) target = $region85
  $region84: #{gcn_predictor_forward.2} parent=0 // pred_region
    _
  $region85: #{gcn_predictor_forward.2} parent=0 // pred_fallthru
    _
  // Predicated region
  $region86: #{gcn_predictor_forward.2} parent=0 // pred_check
    _
  $region87: #{gcn_predictor_forward.2} parent=0 // pred_check_branch
    %747 = sbr.rel (0) target = $region89
  $region88: #{gcn_predictor_forward.2} parent=0 // pred_region
    _
  $region89: #{gcn_predictor_forward.2} parent=0 // pred_fallthru
    _
  // Predicated region
  $region90: #{gcn_predictor_forward.2} parent=0 // pred_check
    _
  $region91: #{gcn_predictor_forward.2} parent=0 // pred_check_branch
    %749 = sbr.rel (0) target = $region93
  $region92: #{gcn_predictor_forward.2} parent=0 // pred_region
    _
  $region93: #{gcn_predictor_forward.2} parent=0 // pred_fallthru
    _

// kernel: gcn_predictor_forward.3
$region0: #{gcn_predictor_forward.3}
  #allocation0 [shape = 'u32[]', space=smem, size = 0x4, offset = 0x4, fixed_abs, tag = 'smem constant byte address 0x4 - core index']
  #allocation1 [shape = 'u32[72,128]{1,0:T(1,128)}', space=vmem, size = 0x9000, scoped, tag = 'internal scratch']
  %s0 = inlined_call_operand.vmem [shape: f32[2,88], index: 0, kind: input, shape index: {}]
  %s1 = inlined_call_operand.vmem [shape: f32[88,256], index: 1, kind: input, shape index: {}]
  %s2 = inlined_call_operand.vmem [shape: f32[1,256], index: 2, kind: input, shape index: {}]
  %s3 = inlined_call_operand.vmem [shape: f32[256,32], index: 3, kind: input, shape index: {}]
  %s4 = inlined_call_operand.vmem [shape: f32[1,32], index: 4, kind: input, shape index: {}]
  %s5 = inlined_call_operand.vmem [shape: f32[32,2], index: 5, kind: input, shape index: {}]
  %s6 = inlined_call_operand.vmem [shape: f32[1,2], index: 6, kind: input, shape index: {}]
  %s7 = inlined_call_operand.hbm [shape: f32[2,2], index: 7, kind: output, shape index: {}]
  %s8 = sld [smem:[#allocation0]]
  $region38: #{gcn_predictor_forward.3} parent=0
    _
  %s10 = ssub.s32 1, %s8
  %s11 = scalar_select 0, %s10, %s8
  $region1: #{gcn_predictor_forward.3} parent=0
    #allocation2 [shape = 'u8[1024]{0}', space=vmem, size = 0x400, scoped, tag = 'output window, operand 0, single buffered']
    #allocation3 [shape = 's32[1]{0}', space=sflag, size = 0x4, scoped, tag = 'scoped memory for gcn_predictor_forward.3']
    %12 = vsyncpa [#allocation3], 0
    // Predicated region
    $region2: #{gcn_predictor_forward.3} parent=1 // pred_check
      _
    $region3: #{gcn_predictor_forward.3} parent=1 // pred_check_branch
      %14 = sbr.rel (0) target = $region5
    $region4: #{gcn_predictor_forward.3} parent=1 // pred_region
      _
    $region5: #{gcn_predictor_forward.3} parent=1 // pred_fallthru
      _
    // Predicated region
    $region6: #{gcn_predictor_forward.3} parent=1 // pred_check
      _
    $region7: #{gcn_predictor_forward.3} parent=1 // pred_check_branch
      %16 = sbr.rel (0) target = $region9
    $region8: #{gcn_predictor_forward.3} parent=1 // pred_region
      _
    $region9: #{gcn_predictor_forward.3} parent=1 // pred_fallthru
      _
    // Predicated region
    $region10: #{gcn_predictor_forward.3} parent=1 // pred_check
      _
    $region11: #{gcn_predictor_forward.3} parent=1 // pred_check_branch
      %18 = sbr.rel (0) target = $region13
    $region12: #{gcn_predictor_forward.3} parent=1 // pred_region
      _
    $region13: #{gcn_predictor_forward.3} parent=1 // pred_fallthru
      _
    // Predicated region
    $region14: #{gcn_predictor_forward.3} parent=1 // pred_check
      _
    $region15: #{gcn_predictor_forward.3} parent=1 // pred_check_branch
      %20 = sbr.rel (0) target = $region17
    $region16: #{gcn_predictor_forward.3} parent=1 // pred_region
      _
    $region17: #{gcn_predictor_forward.3} parent=1 // pred_fallthru
      _
    // Predicated region
    $region18: #{gcn_predictor_forward.3} parent=1 // pred_check
      _
    $region19: #{gcn_predictor_forward.3} parent=1 // pred_check_branch
      %22 = sbr.rel (0) target = $region21
    $region20: #{gcn_predictor_forward.3} parent=1 // pred_region
      _
    $region21: #{gcn_predictor_forward.3} parent=1 // pred_fallthru
      _
    // Predicated region
    $region22: #{gcn_predictor_forward.3} parent=1 // pred_check
      _
    $region23: #{gcn_predictor_forward.3} parent=1 // pred_check_branch
      %24 = sbr.rel (0) target = $region25
    $region24: #{gcn_predictor_forward.3} parent=1 // pred_region
      _
    $region25: #{gcn_predictor_forward.3} parent=1 // pred_fallthru
      _
    // Predicated region
    $region26: #{gcn_predictor_forward.3} parent=1 // pred_check
      _
    $region27: #{gcn_predictor_forward.3} parent=1 // pred_check_branch
      %26 = sbr.rel (0) target = $region29
    $region28: #{gcn_predictor_forward.3} parent=1 // pred_region
      _
    $region29: #{gcn_predictor_forward.3} parent=1 // pred_fallthru
      _
    %v27 = vld [vmem:[%s0] sm:$0x3]
    %v28 = vld [vmem:[%s1] sm:$0xff]
    %v29 = vld [vmem:[%s1 + $0x8] sm:$0xff]
    %v30 = vld [vmem:[%s1 + $0x10] sm:$0xff]
    %v31 = vld [vmem:[%s1 + $0x18] sm:$0xff]
    %v32 = vld [vmem:[%s1 + $0x20] sm:$0xff]
    %v33 = vld [vmem:[%s1 + $0x28] sm:$0xff]
    %v34 = vld [vmem:[%s1 + $0x30] sm:$0xff]
    %v35 = vld [vmem:[%s1 + $0x38] sm:$0xff]
    %v36 = vld [vmem:[%s1 + $0x40] sm:$0xff]
    %v37 = vld [vmem:[%s1 + $0x48] sm:$0xff]
    %v38 = vld [vmem:[%s1 + $0x50] sm:$0xff]
    %v39 = vld [vmem:[%s1 + $0x58] sm:$0xff]
    %v40 = vld [vmem:[%s1 + $0x60] sm:$0xff]
    %v41 = vld [vmem:[%s1 + $0x68] sm:$0xff]
    %v42 = vld [vmem:[%s1 + $0x70] sm:$0xff]
    %v43 = vld [vmem:[%s1 + $0x78] sm:$0xff]
    %v44 = vld [vmem:[%s1 + $0x80] sm:$0xff]
    %v45 = vld [vmem:[%s1 + $0x88] sm:$0xff]
    %v46 = vld [vmem:[%s1 + $0x90] sm:$0xff]
    %v47 = vld [vmem:[%s1 + $0x98] sm:$0xff]
    %v48 = vld [vmem:[%s1 + $0xa0] sm:$0xff]
    %v49 = vld [vmem:[%s1 + $0xa8] sm:$0xff]
    %v50 = vld [vmem:[%s2] sm:$0x3]
    %v52 = vperm.slane %v50, 0
    %v53 = vperm.slane %v50, 1
    %vm56 = vcmask 719872
    %v58 = vsel %vm56, %v27, 0
    %60 = vmatpush.msra.mxu0 0.0
    %61 = vmatpush.msra.mxu0 0.0
    %62 = vmatpush.msra.mxu0 0.0
    %63 = vmatpush.msra.mxu0 0.0
    %64 = vmatpush.msra.mxu0 0.0
    %65 = vmatpush.msra.mxu0 %v48
    %66 = vmatpush.msra.mxu0 %v46
    %67 = vmatpush.msra.mxu0 %v44
    %68 = vmatpush.msra.mxu0 %v42
    %69 = vmatpush.msra.mxu0 %v40
    %70 = vmatpush.msra.mxu0 %v38
    %71 = vmatpush.msra.mxu0 %v36
    %72 = vmatpush.msra.mxu0 %v34
    %73 = vmatpush.msra.mxu0 %v32
    %74 = vmatpush.msra.mxu0 %v30
    %75 = vmatpush.msra.mxu0 %v28
    %76 = vmatmul.f32.gmra.mxu0 %v58
    %v77 = vpop.f32.mrf.mxu0
    %v78 = vadd.f32 %v52, %v77
    %79 = vdwg.mxu0
    %80 = vmatpush.msra.mxu0 0.0
    %81 = vmatpush.msra.mxu0 0.0
    %82 = vmatpush.msra.mxu0 0.0
    %83 = vmatpush.msra.mxu0 0.0
    %84 = vmatpush.msra.mxu0 0.0
    %85 = vmatpush.msra.mxu0 %v49
    %86 = vmatpush.msra.mxu0 %v47
    %87 = vmatpush.msra.mxu0 %v45
    %88 = vmatpush.msra.mxu0 %v43
    %89 = vmatpush.msra.mxu0 %v41
    %90 = vmatpush.msra.mxu0 %v39
    %91 = vmatpush.msra.mxu0 %v37
    %92 = vmatpush.msra.mxu0 %v35
    %93 = vmatpush.msra.mxu0 %v33
    %94 = vmatpush.msra.mxu0 %v31
    %95 = vmatpush.msra.mxu0 %v29
    %96 = vmatmul.f32.gmra.mxu0 %v58
    %v97 = vpop.f32.mrf.mxu0
    %v98 = vadd.f32 %v53, %v97
    %99 = vdwg.mxu0
    %vm100 = vcmp.ge.f32.partialorder %v78, 0.0
    %vm101 = vcmp.ge.f32.partialorder %v98, 0.0
    %v102 = vmul.f32 %v78, 0.2
    %v103 = vmul.f32 %v98, 0.2
    %v104 = vsel %vm100, %v78, %v102
    %v105 = vsel %vm101, %v98, %v103
    %v106 = vld [vmem:[%s3] sm:$0xff]
    %v107 = vld [vmem:[%s3 + $0x8] sm:$0xff]
    %v108 = vld [vmem:[%s3 + $0x10] sm:$0xff]
    %v109 = vld [vmem:[%s3 + $0x18] sm:$0xff]
    %v110 = vld [vmem:[%s3 + $0x20] sm:$0xff]
    %v111 = vld [vmem:[%s3 + $0x28] sm:$0xff]
    %v112 = vld [vmem:[%s3 + $0x30] sm:$0xff]
    %v113 = vld [vmem:[%s3 + $0x38] sm:$0xff]
    %v114 = vld [vmem:[%s3 + $0x40] sm:$0xff]
    %v115 = vld [vmem:[%s3 + $0x48] sm:$0xff]
    %v116 = vld [vmem:[%s3 + $0x50] sm:$0xff]
    %v117 = vld [vmem:[%s3 + $0x58] sm:$0xff]
    %v118 = vld [vmem:[%s3 + $0x60] sm:$0xff]
    %v119 = vld [vmem:[%s3 + $0x68] sm:$0xff]
    %v120 = vld [vmem:[%s3 + $0x70] sm:$0xff]
    %v121 = vld [vmem:[%s3 + $0x78] sm:$0xff]
    %v122 = vld [vmem:[%s3 + $0x80] sm:$0xff]
    %v123 = vld [vmem:[%s3 + $0x88] sm:$0xff]
    %v124 = vld [vmem:[%s3 + $0x90] sm:$0xff]
    %v125 = vld [vmem:[%s3 + $0x98] sm:$0xff]
    %v126 = vld [vmem:[%s3 + $0xa0] sm:$0xff]
    %v127 = vld [vmem:[%s3 + $0xa8] sm:$0xff]
    %v128 = vld [vmem:[%s3 + $0xb0] sm:$0xff]
    %v129 = vld [vmem:[%s3 + $0xb8] sm:$0xff]
    %v130 = vld [vmem:[%s3 + $0xc0] sm:$0xff]
    %v131 = vld [vmem:[%s3 + $0xc8] sm:$0xff]
    %v132 = vld [vmem:[%s3 + $0xd0] sm:$0xff]
    %v133 = vld [vmem:[%s3 + $0xd8] sm:$0xff]
    %v134 = vld [vmem:[%s3 + $0xe0] sm:$0xff]
    %v135 = vld [vmem:[%s3 + $0xe8] sm:$0xff]
    %v136 = vld [vmem:[%s3 + $0xf0] sm:$0xff]
    %v137 = vld [vmem:[%s3 + $0xf8] sm:$0xff]
    %v138 = vld [vmem:[%s4] sm:$0x1]
    %v140 = vperm.slane %v138, 0
    %142 = vmatpush.msra.mxu0 %v121
    %143 = vmatpush.msra.mxu0 %v120
    %144 = vmatpush.msra.mxu0 %v119
    %145 = vmatpush.msra.mxu0 %v118
    %146 = vmatpush.msra.mxu0 %v117
    %147 = vmatpush.msra.mxu0 %v116
    %148 = vmatpush.msra.mxu0 %v115
    %149 = vmatpush.msra.mxu0 %v114
    %150 = vmatpush.msra.mxu0 %v113
    %151 = vmatpush.msra.mxu0 %v112
    %152 = vmatpush.msra.mxu0 %v111
    %153 = vmatpush.msra.mxu0 %v110
    %154 = vmatpush.msra.mxu0 %v109
    %155 = vmatpush.msra.mxu0 %v108
    %156 = vmatpush.msra.mxu0 %v107
    %157 = vmatpush.msra.mxu0 %v106
    %158 = vmatmul.f32.gmra.mxu0 %v104
    %v159 = vpop.f32.mrf.mxu0
    %v160 = vadd.f32 %v140, %v159
    %161 = vdwg.mxu0
    %162 = vmatpush.msra.mxu0 %v137
    %163 = vmatpush.msra.mxu0 %v136
    %164 = vmatpush.msra.mxu0 %v135
    %165 = vmatpush.msra.mxu0 %v134
    %166 = vmatpush.msra.mxu0 %v133
    %167 = vmatpush.msra.mxu0 %v132
    %168 = vmatpush.msra.mxu0 %v131
    %169 = vmatpush.msra.mxu0 %v130
    %170 = vmatpush.msra.mxu0 %v129
    %171 = vmatpush.msra.mxu0 %v128
    %172 = vmatpush.msra.mxu0 %v127
    %173 = vmatpush.msra.mxu0 %v126
    %174 = vmatpush.msra.mxu0 %v125
    %175 = vmatpush.msra.mxu0 %v124
    %176 = vmatpush.msra.mxu0 %v123
    %177 = vmatpush.msra.mxu0 %v122
    %178 = vmatmul.f32.gmra.mxu0 %v105
    %v179 = vpop.f32.mrf.mxu0
    %v180 = vadd.f32 %v160, %v179
    %181 = vdwg.mxu0
    %vm182 = vcmp.ge.f32.partialorder %v180, 0.0
    %v183 = vmul.f32 %v180, 0.2
    %v184 = vsel %vm182, %v180, %v183
    %v185 = vld [vmem:[%s5] sm:$0xff]
    %v186 = vld [vmem:[%s5 + $0x8] sm:$0xff]
    %v187 = vld [vmem:[%s5 + $0x10] sm:$0xff]
    %v188 = vld [vmem:[%s5 + $0x18] sm:$0xff]
    %v189 = vld [vmem:[%s6] sm:$0x1]
    %v191 = vperm.slane %v189, 0
    %vm193 = vcmask 261120
    %v195 = vsel %vm193, %v184, 0
    %197 = vmatpush.msra.mxu0 0.0
    %198 = vmatpush.msra.mxu0 0.0
    %199 = vmatpush.msra.mxu0 0.0
    %200 = vmatpush.msra.mxu0 0.0
    %201 = vmatpush.msra.mxu0 0.0
    %202 = vmatpush.msra.mxu0 0.0
    %203 = vmatpush.msra.mxu0 0.0
    %204 = vmatpush.msra.mxu0 0.0
    %205 = vmatpush.msra.mxu0 0.0
    %206 = vmatpush.msra.mxu0 0.0
    %207 = vmatpush.msra.mxu0 0.0
    %208 = vmatpush.msra.mxu0 0.0
    %209 = vmatpush.msra.mxu0 %v188
    %210 = vmatpush.msra.mxu0 %v187
    %211 = vmatpush.msra.mxu0 %v186
    %212 = vmatpush.msra.mxu0 %v185
    %213 = vmatmul.f32.gmra.mxu0 %v195
    %v214 = vpop.f32.mrf.mxu0
    %v215 = vadd.f32 %v191, %v214
    %216 = vdwg.mxu0
    %vm217 = vcmask 9216
    %218 = vst.msk [vmem:[#allocation2] sm:$0x3] %vm217, %v215
    // Predicated region
    $region30: #{gcn_predictor_forward.3} parent=1 // pred_check
      _
    $region31: #{gcn_predictor_forward.3} parent=1 // pred_check_branch
      %220 = sbr.rel (0) target = $region33
    $region32: #{gcn_predictor_forward.3} parent=1 // pred_region
      %222 = vsyncadd [#allocation3], 0
      %s224 = sshll.u32 [#allocation2], 4
      %s225 = int_to_ptr.vmem [resolvable:$true] %s224
      %s226 = sshll.u32 %s7, 4
      %s227 = int_to_ptr.hbm [resolvable:$true] %s226
      %229 = dma.vmem_to_hbm [thread:$0]  %s225, 32, %s227, [#allocation3]
    $region33: #{gcn_predictor_forward.3} parent=1 // pred_fallthru
      _
    // Predicated region
    $region34: #{gcn_predictor_forward.3} parent=1 // pred_check
      _
    $region35: #{gcn_predictor_forward.3} parent=1 // pred_check_branch
      %231 = sbr.rel (0) target = $region37
    $region36: #{gcn_predictor_forward.3} parent=1 // pred_region
      %233 = dma.done [#allocation3], 32
    $region37: #{gcn_predictor_forward.3} parent=1 // pred_fallthru
      _
    %234 = vsyncpa [#allocation3], 1

</llo_original>
